<compile_context>
chip_gen: v7x
topology: tpu7x:2x2x1
jax: 0.10.0
libtpu: 0.0.40
codegen_flags: <defaults>
</compile_context>

<pallas_src>
import jax
import jax.numpy as jnp
from jax import lax
from jax.experimental import pallas as pl
from jax.experimental.pallas import tpu as pltpu


# ---------------------------------------------------------------------------
# Kernel
# ---------------------------------------------------------------------------
def mlp_kernel(alpha_ref, b6_ref,            # SMEM: (5,) PReLU slopes, (1,) final bias
               x_ref,                        # VMEM (tb, E) bf16 batch tile
               w1_ref, b1_ref, w2_ref, b2_ref,
               w3_ref, b3_ref, w4_ref, b4_ref,
               w5_ref, b5_ref,               # bf16 weights (BN folded), f32 biases
               w6t_ref,                      # (8, 64) bf16; row 0 = Linear(64,1) weight^T
               o_ref):                       # VMEM (1, tb) f32 lane-dense logits
    """One batch tile of the full MLP; weights stay VMEM-resident across grid steps."""

    def prelu(h, a):
        # nn.PReLU() default: a single shared slope.
        return jnp.where(h >= 0.0, h, a * h)

    def layer(h_bf16, w_ref, b_ref):
        # bf16 x bf16 MXU matmul with f32 accumulation; bias/activation math in f32.
        return jnp.dot(h_bf16, w_ref[...], preferred_element_type=jnp.float32) + b_ref[...]

    h = prelu(layer(x_ref[...], w1_ref, b1_ref), alpha_ref[0])                 # E   -> 128
    h = prelu(layer(h.astype(jnp.bfloat16), w2_ref, b2_ref), alpha_ref[1])     # 128 -> 128
    h = prelu(layer(h.astype(jnp.bfloat16), w3_ref, b3_ref), alpha_ref[2])     # 128 -> 128
    h = prelu(layer(h.astype(jnp.bfloat16), w4_ref, b4_ref), alpha_ref[3])     # 128 -> 128
    h = prelu(layer(h.astype(jnp.bfloat16), w5_ref, b5_ref), alpha_ref[4])     # 128 -> 64

    # Final Linear(64,1) as logits^T = w6^T @ h^T -> lane-dense (8, tb); rows 1..7 zero.
    logits = lax.dot_general(
        w6t_ref[...], h.astype(jnp.bfloat16),
        dimension_numbers=(((1,), (1,)), ((), ())),       # contract on dim 64 (trans_b)
        preferred_element_type=jnp.float32)
    o_ref[...] = logits[0:1, :] + b6_ref[0]


# ---------------------------------------------------------------------------
# Wrapper
# ---------------------------------------------------------------------------
def _round_up(n, m):
    return (n + m - 1) // m * m


def bertweet_mlp128(x, kparams, *, tile_b=512):
    """x: (B, E) float (f32 or bf16) -> (B, 1) f32 logits."""
    B, E = x.shape
    if x.dtype != jnp.bfloat16:
        # Ideally callers hand us bf16 activations; the kernel consumes bf16 either way,
        # so reading f32 from HBM would just double the streamed bytes.
        x = x.astype(jnp.bfloat16)

    # Batch tile: multiple of 8 sublanes, >=2 grid steps whenever B > 8 (lets v7x shard
    # tiles across its 2 TensorCores), capped at tile_b to amortize per-step overhead
    # while keeping the footprint tiny.  The last block may be partial (no jnp.pad);
    # its garbage tail lanes are discarded by the slice at the end.
    tile_b = _round_up(max(int(tile_b), 8), 8)
    tb = max(8, min(tile_b, _round_up(pl.cdiv(B, 2), 8)))
    g = pl.cdiv(B, tb)

    def resident(shape):
        # Constant block index -> fetched once, stays VMEM-resident across the grid.
        return pl.BlockSpec(shape, lambda i: (0, 0))

    in_specs = [
        pl.BlockSpec(memory_space=pltpu.MemorySpace.SMEM),   # alpha (5,) PReLU slopes
        pl.BlockSpec(memory_space=pltpu.MemorySpace.SMEM),   # b6 (1,) final bias
        pl.BlockSpec((tb, E), lambda i: (i, 0)),             # x batch tile (bf16)
        resident((E, 128)),   resident((1, 128)),            # w1, b1
        resident((128, 128)), resident((1, 128)),            # w2, b2
        resident((128, 128)), resident((1, 128)),            # w3, b3
        resident((128, 128)), resident((1, 128)),            # w4, b4
        resident((128, 64)),  resident((1, 64)),             # w5, b5
        resident((8, 64)),                                    # w6t (row 0 = weights)
    ]
    # Lane-dense logits: (g, 1, tb) f32; leading grid dim squeezed inside the kernel.
    out_specs = pl.BlockSpec((None, 1, tb), lambda i: (i, 0, 0))

    # Advisory cost estimate matching the real (bf16 x, packed logit) HBM footprint.
    param_bytes = sum(int(v.size) * v.dtype.itemsize for v in kparams.values())
    flops = 2 * int(B) * (int(E) * 128 + 3 * 128 * 128 + 128 * 64 + 64 * 1)
    bytes_accessed = int(B) * int(E) * 2 + param_bytes + int(g) * int(tb) * 4
    cost = pl.CostEstimate(flops=flops, transcendentals=0, bytes_accessed=bytes_accessed)

    out = pl.pallas_call(
        mlp_kernel,
        out_shape=jax.ShapeDtypeStruct((g, 1, tb), jnp.float32),
        grid=(g,),
        in_specs=in_specs,
        out_specs=out_specs,
        compiler_params=pltpu.CompilerParams(
            dimension_semantics=("parallel",),      # independent batch tiles (v7x: 2 TCs)
            vmem_limit_bytes=32 * 1024 * 1024,      # actual footprint is ~2-4 MiB
        ),
        cost_estimate=cost,
    )(kparams["alpha"], kparams["b6"], x,
      kparams["w1"], kparams["b1"], kparams["w2"], kparams["b2"],
      kparams["w3"], kparams["b3"], kparams["w4"], kparams["b4"],
      kparams["w5"], kparams["b5"], kparams["w6t"])

    return out.reshape(g * tb)[:B].reshape(B, 1)


# ---------------------------------------------------------------------------
# Parameters (synthetic, deterministic) + eval-mode BN folding
# ---------------------------------------------------------------------------
_DIMS = [None, 128, 128, 128, 128, 64, 1]   # index 0 replaced by embedding_dim
_BN_DIMS = (128, 128, 128, 128, 64)
_BN_EPS = 1e-5


def init_raw_params(key, embedding_dim):
    """Torch-like Linear init, randomized BN running stats, PReLU slopes = 0.25."""
    dims = list(_DIMS)
    dims[0] = embedding_dim
    keys = iter(jax.random.split(key, 32))
    raw = {}
    for li, (din, dout) in enumerate(zip(dims[:-1], dims[1:]), start=1):
        bound = float(1.0 / (din ** 0.5))
        raw[f"w{li}"] = jax.random.uniform(next(keys), (din, dout), jnp.float32, -bound, bound)
        raw[f"b{li}"] = jax.random.uniform(next(keys), (1, dout), jnp.float32, -bound, bound)
    for li, d in zip(range(1, 6), _BN_DIMS):
        raw[f"g{li}"] = 1.0 + 0.1 * jax.random.normal(next(keys), (1, d), jnp.float32)
        raw[f"be{li}"] = 0.1 * jax.random.normal(next(keys), (1, d), jnp.float32)
        raw[f"m{li}"] = 0.1 * jax.random.normal(next(keys), (1, d), jnp.float32)
        raw[f"v{li}"] = jnp.abs(1.0 + 0.1 * jax.random.normal(next(keys), (1, d), jnp.float32))
    raw["alpha"] = jnp.full((5,), 0.25, jnp.float32)
    return raw


def fold_params(raw):
    """Fold eval-mode BatchNorm into the preceding Linear (exact in f32)."""
    folded = {"alpha": raw["alpha"]}
    for li in range(1, 6):
        s = raw[f"g{li}"] / jnp.sqrt(raw[f"v{li}"] + _BN_EPS)     # (1, d)
        t = raw[f"be{li}"] - s * raw[f"m{li}"]
        folded[f"w{li}"] = raw[f"w{li}"] * s                      # scale output columns
        folded[f"b{li}"] = raw[f"b{li}"] * s + t
    folded["w6"] = raw["w6"]                                      # (64, 1), no BN after
    folded["b6"] = raw["b6"]                                      # (1, 1)
    return folded


def to_kernel_params(folded, weight_dtype=jnp.bfloat16):
    """Kernel-layout params: bf16 weights for the MXU, f32 biases/slopes, packed w6^T."""
    kp = {"alpha": folded["alpha"], "b6": folded["b6"].reshape(1)}
    for li in range(1, 6):
        kp[f"w{li}"] = folded[f"w{li}"].astype(weight_dtype)
        kp[f"b{li}"] = folded[f"b{li}"]
    # Linear(64,1) weight transposed into row 0 of an (8, 64) tile for the trans_b matmul.
    w6t = jnp.zeros((8, 64), jnp.float32).at[0, :].set(folded["w6"][:, 0])
    kp["w6t"] = w6t.astype(weight_dtype)
    return kp


# ---------------------------------------------------------------------------
# Plain-JAX references
# ---------------------------------------------------------------------------
def _prelu(h, a):
    return jnp.where(h >= 0.0, h, a * h)


def reference_forward_raw(x, raw):
    """Unfolded f32 eval-mode forward (matches PyTorch model.eval())."""
    h = x
    for li in range(1, 6):
        h = h @ raw[f"w{li}"] + raw[f"b{li}"]
        h = (h - raw[f"m{li}"]) / jnp.sqrt(raw[f"v{li}"] + _BN_EPS) * raw[f"g{li}"] + raw[f"be{li}"]
        h = _prelu(h, raw["alpha"][li - 1])
        # Dropout: identity in eval mode.
    return h @ raw["w6"] + raw["b6"]


def reference_forward_folded(x, folded, emulate_bf16):
    """BN-folded forward; optionally emulates the kernel's bf16 matmul inputs."""
    def mm(h, w):
        if emulate_bf16:
            h = h.astype(jnp.bfloat16).astype(jnp.float32)
            w = w.astype(jnp.bfloat16).astype(jnp.float32)
        return h @ w
    h = x
    for li in range(1, 6):
        h = _prelu(mm(h, folded[f"w{li}"]) + folded[f"b{li}"], folded["alpha"][li - 1])
    return mm(h, folded["w6"]) + folded["b6"]


# ---------------------------------------------------------------------------
if __name__ == "__main__":
    key = jax.random.PRNGKey(0)
    k_param, k_x = jax.random.split(key)

    batch, embedding_dim = 20, 768   # BERTweet-base hidden size; small batch
    raw = init_raw_params(k_param, embedding_dim)
    folded = fold_params(raw)
    kparams = to_kernel_params(folded)

    x = jax.random.normal(k_x, (batch, embedding_dim), jnp.float32)

    # batch=20 -> tb=16, grid=(2,): exercises multi-tile grid + partial final block.
    out = jax.block_until_ready(bertweet_mlp128(x, kparams))
    assert out.shape == (batch, 1), out.shape

    # (1) BN folding is exact in f32.
    ref_raw = reference_forward_raw(x, raw)
    ref_fold = reference_forward_folded(x, folded, emulate_bf16=False)
    assert jnp.allclose(ref_fold, ref_raw, atol=1e-4, rtol=1e-4)

    # (2) Kernel matches the same math with bf16 matmul inputs / f32 accumulation.
    ref_kernel = reference_forward_folded(x, folded, emulate_bf16=True)
    assert jnp.allclose(out, ref_kernel, atol=5e-3, rtol=5e-3)

    print("KERNEL_OK")
</pallas_src>

<mosaic_0001>
module attributes {stable_mosaic.version = 11 : i64} {
  func.func @mlp_kernel(%arg0: i32, %arg1: memref<5xf32, #tpu.memory_space<smem>>, %arg2: memref<1xf32, #tpu.memory_space<smem>>, %arg3: memref<16x768xbf16, #tpu.memory_space<vmem>>, %arg4: memref<768x128xbf16, #tpu.memory_space<vmem>>, %arg5: memref<1x128xf32, #tpu.memory_space<vmem>>, %arg6: memref<128x128xbf16, #tpu.memory_space<vmem>>, %arg7: memref<1x128xf32, #tpu.memory_space<vmem>>, %arg8: memref<128x128xbf16, #tpu.memory_space<vmem>>, %arg9: memref<1x128xf32, #tpu.memory_space<vmem>>, %arg10: memref<128x128xbf16, #tpu.memory_space<vmem>>, %arg11: memref<1x128xf32, #tpu.memory_space<vmem>>, %arg12: memref<128x64xbf16, #tpu.memory_space<vmem>>, %arg13: memref<1x64xf32, #tpu.memory_space<vmem>>, %arg14: memref<8x64xbf16, #tpu.memory_space<vmem>>, %arg15: memref<1x1x16xf32, #tpu.memory_space<vmem>>) attributes {dimension_semantics = [#tpu.dimension_semantics<parallel>], iteration_bounds = array<i64: 2>, scalar_prefetch = 0 : i64, scratch_operands = 0 : i64, tpu.core_type = #tpu.core_type<tc>, window_params = [{transform_indices = @transform_0, window_bounds = array<i64: 5>}, {transform_indices = @transform_1, window_bounds = array<i64: 1>}, {transform_indices = @transform_2, window_bounds = array<i64: 16, 768>}, {pipeline_mode = #tpu.pipeline_mode<synchronous>, transform_indices = @transform_3, window_bounds = array<i64: 768, 128>}, {pipeline_mode = #tpu.pipeline_mode<synchronous>, transform_indices = @transform_4, window_bounds = array<i64: 1, 128>}, {pipeline_mode = #tpu.pipeline_mode<synchronous>, transform_indices = @transform_5, window_bounds = array<i64: 128, 128>}, {pipeline_mode = #tpu.pipeline_mode<synchronous>, transform_indices = @transform_6, window_bounds = array<i64: 1, 128>}, {pipeline_mode = #tpu.pipeline_mode<synchronous>, transform_indices = @transform_7, window_bounds = array<i64: 128, 128>}, {pipeline_mode = #tpu.pipeline_mode<synchronous>, transform_indices = @transform_8, window_bounds = array<i64: 1, 128>}, {pipeline_mode = #tpu.pipeline_mode<synchronous>, transform_indices = @transform_9, window_bounds = array<i64: 128, 128>}, {pipeline_mode = #tpu.pipeline_mode<synchronous>, transform_indices = @transform_10, window_bounds = array<i64: 1, 128>}, {pipeline_mode = #tpu.pipeline_mode<synchronous>, transform_indices = @transform_11, window_bounds = array<i64: 128, 64>}, {pipeline_mode = #tpu.pipeline_mode<synchronous>, transform_indices = @transform_12, window_bounds = array<i64: 1, 64>}, {pipeline_mode = #tpu.pipeline_mode<synchronous>, transform_indices = @transform_13, window_bounds = array<i64: 8, 64>}, {transform_indices = @transform_14, window_bounds = array<i64: 1, 1, 16>}]} {
    %c0 = arith.constant 0 : index
    %c0_0 = arith.constant 0 : index
    %0 = vector.load %arg3[%c0, %c0_0] : memref<16x768xbf16, #tpu.memory_space<vmem>>, vector<16x768xbf16>
    %c0_1 = arith.constant 0 : index
    %c0_2 = arith.constant 0 : index
    %1 = vector.load %arg4[%c0_1, %c0_2] : memref<768x128xbf16, #tpu.memory_space<vmem>>, vector<768x128xbf16>
    %cst = arith.constant dense<0.000000e+00> : vector<16x128xf32>
    %2 = tpu.matmul %0, %1, %cst {dimension_numbers = #tpu.dot_dimension_numbers<[1], [0], [0], [1], [0, 0, 1, 1], [], []>} : vector<16x768xbf16>, vector<768x128xbf16>, vector<16x128xf32> -> vector<16x128xf32>
    %c0_3 = arith.constant 0 : index
    %c0_4 = arith.constant 0 : index
    %3 = vector.load %arg5[%c0_3, %c0_4] : memref<1x128xf32, #tpu.memory_space<vmem>>, vector<1x128xf32>
    %4 = vector.broadcast %3 : vector<1x128xf32> to vector<16x128xf32>
    %5 = arith.addf %2, %4 : vector<16x128xf32>
    %c0_5 = arith.constant 0 : index
    %6 = memref.load %arg1[%c0_5] : memref<5xf32, #tpu.memory_space<smem>>
    %cst_6 = arith.constant 0.000000e+00 : f32
    %7 = vector.broadcast %cst_6 : f32 to vector<16x128xf32>
    %8 = arith.cmpf oge, %5, %7 : vector<16x128xf32>
    %9 = vector.broadcast %6 : f32 to vector<16x128xf32>
    %10 = arith.mulf %9, %5 : vector<16x128xf32>
    %11 = arith.select %8, %5, %10 : vector<16x128xi1>, vector<16x128xf32>
    %12 = arith.truncf %11 : vector<16x128xf32> to vector<16x128xbf16>
    %c0_7 = arith.constant 0 : index
    %c0_8 = arith.constant 0 : index
    %13 = vector.load %arg6[%c0_7, %c0_8] : memref<128x128xbf16, #tpu.memory_space<vmem>>, vector<128x128xbf16>
    %cst_9 = arith.constant dense<0.000000e+00> : vector<16x128xf32>
    %14 = tpu.matmul %12, %13, %cst_9 {dimension_numbers = #tpu.dot_dimension_numbers<[1], [0], [0], [1], [0, 0, 1, 1], [], []>} : vector<16x128xbf16>, vector<128x128xbf16>, vector<16x128xf32> -> vector<16x128xf32>
    %c0_10 = arith.constant 0 : index
    %c0_11 = arith.constant 0 : index
    %15 = vector.load %arg7[%c0_10, %c0_11] : memref<1x128xf32, #tpu.memory_space<vmem>>, vector<1x128xf32>
    %16 = vector.broadcast %15 : vector<1x128xf32> to vector<16x128xf32>
    %17 = arith.addf %14, %16 : vector<16x128xf32>
    %c1 = arith.constant 1 : index
    %18 = memref.load %arg1[%c1] : memref<5xf32, #tpu.memory_space<smem>>
    %cst_12 = arith.constant 0.000000e+00 : f32
    %19 = vector.broadcast %cst_12 : f32 to vector<16x128xf32>
    %20 = arith.cmpf oge, %17, %19 : vector<16x128xf32>
    %21 = vector.broadcast %18 : f32 to vector<16x128xf32>
    %22 = arith.mulf %21, %17 : vector<16x128xf32>
    %23 = arith.select %20, %17, %22 : vector<16x128xi1>, vector<16x128xf32>
    %24 = arith.truncf %23 : vector<16x128xf32> to vector<16x128xbf16>
    %c0_13 = arith.constant 0 : index
    %c0_14 = arith.constant 0 : index
    %25 = vector.load %arg8[%c0_13, %c0_14] : memref<128x128xbf16, #tpu.memory_space<vmem>>, vector<128x128xbf16>
    %cst_15 = arith.constant dense<0.000000e+00> : vector<16x128xf32>
    %26 = tpu.matmul %24, %25, %cst_15 {dimension_numbers = #tpu.dot_dimension_numbers<[1], [0], [0], [1], [0, 0, 1, 1], [], []>} : vector<16x128xbf16>, vector<128x128xbf16>, vector<16x128xf32> -> vector<16x128xf32>
    %c0_16 = arith.constant 0 : index
    %c0_17 = arith.constant 0 : index
    %27 = vector.load %arg9[%c0_16, %c0_17] : memref<1x128xf32, #tpu.memory_space<vmem>>, vector<1x128xf32>
    %28 = vector.broadcast %27 : vector<1x128xf32> to vector<16x128xf32>
    %29 = arith.addf %26, %28 : vector<16x128xf32>
    %c2 = arith.constant 2 : index
    %30 = memref.load %arg1[%c2] : memref<5xf32, #tpu.memory_space<smem>>
    %cst_18 = arith.constant 0.000000e+00 : f32
    %31 = vector.broadcast %cst_18 : f32 to vector<16x128xf32>
    %32 = arith.cmpf oge, %29, %31 : vector<16x128xf32>
    %33 = vector.broadcast %30 : f32 to vector<16x128xf32>
    %34 = arith.mulf %33, %29 : vector<16x128xf32>
    %35 = arith.select %32, %29, %34 : vector<16x128xi1>, vector<16x128xf32>
    %36 = arith.truncf %35 : vector<16x128xf32> to vector<16x128xbf16>
    %c0_19 = arith.constant 0 : index
    %c0_20 = arith.constant 0 : index
    %37 = vector.load %arg10[%c0_19, %c0_20] : memref<128x128xbf16, #tpu.memory_space<vmem>>, vector<128x128xbf16>
    %cst_21 = arith.constant dense<0.000000e+00> : vector<16x128xf32>
    %38 = tpu.matmul %36, %37, %cst_21 {dimension_numbers = #tpu.dot_dimension_numbers<[1], [0], [0], [1], [0, 0, 1, 1], [], []>} : vector<16x128xbf16>, vector<128x128xbf16>, vector<16x128xf32> -> vector<16x128xf32>
    %c0_22 = arith.constant 0 : index
    %c0_23 = arith.constant 0 : index
    %39 = vector.load %arg11[%c0_22, %c0_23] : memref<1x128xf32, #tpu.memory_space<vmem>>, vector<1x128xf32>
    %40 = vector.broadcast %39 : vector<1x128xf32> to vector<16x128xf32>
    %41 = arith.addf %38, %40 : vector<16x128xf32>
    %c3 = arith.constant 3 : index
    %42 = memref.load %arg1[%c3] : memref<5xf32, #tpu.memory_space<smem>>
    %cst_24 = arith.constant 0.000000e+00 : f32
    %43 = vector.broadcast %cst_24 : f32 to vector<16x128xf32>
    %44 = arith.cmpf oge, %41, %43 : vector<16x128xf32>
    %45 = vector.broadcast %42 : f32 to vector<16x128xf32>
    %46 = arith.mulf %45, %41 : vector<16x128xf32>
    %47 = arith.select %44, %41, %46 : vector<16x128xi1>, vector<16x128xf32>
    %48 = arith.truncf %47 : vector<16x128xf32> to vector<16x128xbf16>
    %c0_25 = arith.constant 0 : index
    %c0_26 = arith.constant 0 : index
    %49 = vector.load %arg12[%c0_25, %c0_26] : memref<128x64xbf16, #tpu.memory_space<vmem>>, vector<128x64xbf16>
    %cst_27 = arith.constant dense<0.000000e+00> : vector<16x64xf32>
    %50 = tpu.matmul %48, %49, %cst_27 {dimension_numbers = #tpu.dot_dimension_numbers<[1], [0], [0], [1], [0, 0, 1, 1], [], []>} : vector<16x128xbf16>, vector<128x64xbf16>, vector<16x64xf32> -> vector<16x64xf32>
    %c0_28 = arith.constant 0 : index
    %c0_29 = arith.constant 0 : index
    %51 = vector.load %arg13[%c0_28, %c0_29] : memref<1x64xf32, #tpu.memory_space<vmem>>, vector<1x64xf32>
    %52 = vector.broadcast %51 : vector<1x64xf32> to vector<16x64xf32>
    %53 = arith.addf %50, %52 : vector<16x64xf32>
    %c4 = arith.constant 4 : index
    %54 = memref.load %arg1[%c4] : memref<5xf32, #tpu.memory_space<smem>>
    %cst_30 = arith.constant 0.000000e+00 : f32
    %55 = vector.broadcast %cst_30 : f32 to vector<16x64xf32>
    %56 = arith.cmpf oge, %53, %55 : vector<16x64xf32>
    %57 = vector.broadcast %54 : f32 to vector<16x64xf32>
    %58 = arith.mulf %57, %53 : vector<16x64xf32>
    %59 = arith.select %56, %53, %58 : vector<16x64xi1>, vector<16x64xf32>
    %c0_31 = arith.constant 0 : index
    %c0_32 = arith.constant 0 : index
    %60 = vector.load %arg14[%c0_31, %c0_32] : memref<8x64xbf16, #tpu.memory_space<vmem>>, vector<8x64xbf16>
    %61 = arith.truncf %59 : vector<16x64xf32> to vector<16x64xbf16>
    %cst_33 = arith.constant dense<0.000000e+00> : vector<8x16xf32>
    %62 = tpu.matmul %60, %61, %cst_33 {dimension_numbers = #tpu.dot_dimension_numbers<[1], [1], [0], [0], [0, 0, 1, 0], [], []>} : vector<8x64xbf16>, vector<16x64xbf16>, vector<8x16xf32> -> vector<8x16xf32>
    %63 = vector.extract_strided_slice %62 {offsets = [0, 0], sizes = [1, 16], strides = [1, 1]} : vector<8x16xf32> to vector<1x16xf32>
    %c0_34 = arith.constant 0 : index
    %64 = memref.load %arg2[%c0_34] : memref<1xf32, #tpu.memory_space<smem>>
    %65 = vector.broadcast %64 : f32 to vector<1x16xf32>
    %66 = arith.addf %63, %65 : vector<1x16xf32>
    %c0_35 = arith.constant 0 : index
    %c0_36 = arith.constant 0 : index
    %c0_37 = arith.constant 0 : index
    %67 = vector.load %arg15[%c0_35, %c0_36, %c0_37] : memref<1x1x16xf32, #tpu.memory_space<vmem>>, vector<1x1x16xf32>
    %68 = vector.shape_cast %67 : vector<1x1x16xf32> to vector<1x16xf32>
    %69 = vector.shape_cast %66 : vector<1x16xf32> to vector<1x1x16xf32>
    tpu.vector_store %arg15[%c0_35, %c0_36, %c0_37], %69 {strides = array<i32>} : memref<1x1x16xf32, #tpu.memory_space<vmem>>, vector<1x1x16xf32>,
    return
  }
  func.func @transform_0(%arg0: i32) -> i32 {
    %c0_i32 = arith.constant 0 : i32
    %c0_i32_0 = arith.constant 0 : i32
    return %c0_i32 : i32
  }
  func.func @transform_1(%arg0: i32) -> i32 {
    %c0_i32 = arith.constant 0 : i32
    %c0_i32_0 = arith.constant 0 : i32
    return %c0_i32 : i32
  }
  func.func @transform_2(%arg0: i32) -> (i32, i32) {
    %c0_i32 = arith.constant 0 : i32
    %c0_i32_0 = arith.constant 0 : i32
    return %arg0, %c0_i32 : i32, i32
  }
  func.func @transform_3(%arg0: i32) -> (i32, i32) {
    %c0_i32 = arith.constant 0 : i32
    %c0_i32_0 = arith.constant 0 : i32
    %c0_i32_1 = arith.constant 0 : i32
    return %c0_i32, %c0_i32_0 : i32, i32
  }
  func.func @transform_4(%arg0: i32) -> (i32, i32) {
    %c0_i32 = arith.constant 0 : i32
    %c0_i32_0 = arith.constant 0 : i32
    %c0_i32_1 = arith.constant 0 : i32
    return %c0_i32, %c0_i32_0 : i32, i32
  }
  func.func @transform_5(%arg0: i32) -> (i32, i32) {
    %c0_i32 = arith.constant 0 : i32
    %c0_i32_0 = arith.constant 0 : i32
    %c0_i32_1 = arith.constant 0 : i32
    return %c0_i32, %c0_i32_0 : i32, i32
  }
  func.func @transform_6(%arg0: i32) -> (i32, i32) {
    %c0_i32 = arith.constant 0 : i32
    %c0_i32_0 = arith.constant 0 : i32
    %c0_i32_1 = arith.constant 0 : i32
    return %c0_i32, %c0_i32_0 : i32, i32
  }
  func.func @transform_7(%arg0: i32) -> (i32, i32) {
    %c0_i32 = arith.constant 0 : i32
    %c0_i32_0 = arith.constant 0 : i32
    %c0_i32_1 = arith.constant 0 : i32
    return %c0_i32, %c0_i32_0 : i32, i32
  }
  func.func @transform_8(%arg0: i32) -> (i32, i32) {
    %c0_i32 = arith.constant 0 : i32
    %c0_i32_0 = arith.constant 0 : i32
    %c0_i32_1 = arith.constant 0 : i32
    return %c0_i32, %c0_i32_0 : i32, i32
  }
  func.func @transform_9(%arg0: i32) -> (i32, i32) {
    %c0_i32 = arith.constant 0 : i32
    %c0_i32_0 = arith.constant 0 : i32
    %c0_i32_1 = arith.constant 0 : i32
    return %c0_i32, %c0_i32_0 : i32, i32
  }
  func.func @transform_10(%arg0: i32) -> (i32, i32) {
    %c0_i32 = arith.constant 0 : i32
    %c0_i32_0 = arith.constant 0 : i32
    %c0_i32_1 = arith.constant 0 : i32
    return %c0_i32, %c0_i32_0 : i32, i32
  }
  func.func @transform_11(%arg0: i32) -> (i32, i32) {
    %c0_i32 = arith.constant 0 : i32
    %c0_i32_0 = arith.constant 0 : i32
    %c0_i32_1 = arith.constant 0 : i32
    return %c0_i32, %c0_i32_0 : i32, i32
  }
  func.func @transform_12(%arg0: i32) -> (i32, i32) {
    %c0_i32 = arith.constant 0 : i32
    %c0_i32_0 = arith.constant 0 : i32
    %c0_i32_1 = arith.constant 0 : i32
    return %c0_i32, %c0_i32_0 : i32, i32
  }
  func.func @transform_13(%arg0: i32) -> (i32, i32) {
    %c0_i32 = arith.constant 0 : i32
    %c0_i32_0 = arith.constant 0 : i32
    %c0_i32_1 = arith.constant 0 : i32
    return %c0_i32, %c0_i32_0 : i32, i32
  }
  func.func @transform_14(%arg0: i32) -> (i32, i32, i32) {
    %c0_i32 = arith.constant 0 : i32
    %c0_i32_0 = arith.constant 0 : i32
    %c0_i32_1 = arith.constant 0 : i32
    return %arg0, %c0_i32, %c0_i32_0 : i32, i32, i32
  }
}

</mosaic_0001>

<llo_original>
// kernel: tpu_custom_call.1
$region0: #{tpu_custom_call.1}
  #allocation0 [shape = 'u32[]', space=smem, size = 0x4, offset = 0x4, fixed_abs, tag = 'smem constant byte address 0x4 - core index']
  #allocation1 [shape = 'u32[144,128]{1,0:T(1,128)}', space=vmem, size = 0x12000, scoped, tag = 'internal scratch']
  #allocation2 [shape = 'f32[1]{0:T(128)S(6)}', space=smem, size = 0x200, scoped, tag = 'scoped memory for tpu_custom_call.1']
  %s0 = inlined_call_operand.vmem [shape: f32[5], index: 0, kind: input, shape index: {}]
  %s1 = inlined_call_operand.<no memory space> [shape: f32[1], index: 1, kind: input, shape index: {}]
  %s2 = inlined_call_operand.vmem [shape: bf16[20,768], index: 2, kind: input, shape index: {}]
  %s3 = inlined_call_operand.hbm [shape: bf16[768,128], index: 3, kind: input, shape index: {}]
  %s4 = inlined_call_operand.vmem [shape: f32[1,128], index: 4, kind: input, shape index: {}]
  %s5 = inlined_call_operand.hbm [shape: bf16[128,128], index: 5, kind: input, shape index: {}]
  %s6 = inlined_call_operand.vmem [shape: f32[1,128], index: 6, kind: input, shape index: {}]
  %s7 = inlined_call_operand.hbm [shape: bf16[128,128], index: 7, kind: input, shape index: {}]
  %s8 = inlined_call_operand.vmem [shape: f32[1,128], index: 8, kind: input, shape index: {}]
  %s9 = inlined_call_operand.hbm [shape: bf16[128,128], index: 9, kind: input, shape index: {}]
  %s10 = inlined_call_operand.vmem [shape: f32[1,128], index: 10, kind: input, shape index: {}]
  %s11 = inlined_call_operand.vmem [shape: bf16[128,64], index: 11, kind: input, shape index: {}]
  %s12 = inlined_call_operand.vmem [shape: f32[1,64], index: 12, kind: input, shape index: {}]
  %s13 = inlined_call_operand.vmem [shape: bf16[8,64], index: 13, kind: input, shape index: {}]
  %s14 = inlined_call_operand.hbm [shape: f32[2,1,16], index: 14, kind: output, shape index: {}]
  %s15 = sld [smem:[#allocation0]]
  $region109: #{tpu_custom_call.1} parent=0
    _
  %s17 = ssub.s32 1, %s15
  %s18 = scalar_select 0, %s17, %s15
  %19 = sst [smem:[#allocation2]] %s1
  $region1: #{tpu_custom_call.1} parent=0
    #allocation3 [shape = 'u8[512]{0}', space=smem, size = 0x200, scoped, tag = 'input window, operand 0, single buffered']
    #allocation4 [shape = 's32[2]{0}', space=sflag, size = 0x8, scoped, tag = 'scoped memory for tpu_custom_call.1']
    #allocation5 [shape = 's32[2]{0}', space=sflag, size = 0x8, scoped, tag = 'scoped memory for tpu_custom_call.1']
    #allocation6 [shape = 's32[2]{0}', space=sflag, size = 0x8, scoped, tag = 'scoped memory for tpu_custom_call.1']
    #allocation7 [shape = 'u8[196608]{0}', space=vmem, size = 0x30000, scoped, tag = 'input window, operand 3, single buffered']
    #allocation8 [shape = 'u8[32768]{0}', space=vmem, size = 0x8000, scoped, tag = 'input window, operand 5, single buffered']
    #allocation9 [shape = 's32[1]{0}', space=sflag, size = 0x4, scoped, tag = 'scoped memory for tpu_custom_call.1']
    #allocation10 [shape = 'u8[32768]{0}', space=vmem, size = 0x8000, scoped, tag = 'input window, operand 7, single buffered']
    #allocation11 [shape = 'u8[32768]{0}', space=vmem, size = 0x8000, scoped, tag = 'input window, operand 9, single buffered']
    #allocation12 [shape = 's32[1]{0}', space=sflag, size = 0x4, scoped, tag = 'scoped memory for tpu_custom_call.1']
    #allocation13 [shape = 'u8[1024]{0}', space=vmem, size = 0x400, scoped, tag = 'output window, operand 0']
    %20 = vsyncpa [#allocation6], 0
    %21 = vsyncpa [#allocation4], 0
    %22 = vsyncpa [#allocation9], 0
    %23 = vsyncpa [#allocation12], 0
    %24 = vsyncpa [#allocation5], 0
    %s25 = scalar_lea.sflag [#allocation5], 1
    %26 = vsyncpa %s25, 0
    loop: start=0, step=1, limit=4
    $region2: #{tpu_custom_call.1} parent=1 // loop_pre_header
      _
    $region3: #{tpu_custom_call.1} parent=1 // loop_header
      %s28 = sphi 0, %s32
      %p29 = scmp.ge.s32.totalorder %s28, 4
      %s36 = sphi 0, %s36
      %s38 = sphi 0, %s36
      %s39 = sphi 0, %s38
      %s53 = sphi 0, %s39
      %s57 = sphi 0, %s57
      %s59 = sphi 0, %s57
      %s60 = sphi 0, %s59
      %s74 = sphi 0, %s60
      %s80 = sphi 0, %s82
      %s83 = sphi 0, %s80
      %s84 = sphi 0, %s83
      %s100 = sphi 0, %s84
      %s104 = sphi 0, %s104
      %s106 = sphi 0, %s104
      %s107 = sphi 0, %s106
      %s121 = sphi 0, %s107
      %s125 = sphi 0, %s125
      %s127 = sphi 0, %s125
      %s128 = sphi 0, %s127
      %s142 = sphi 0, %s128
      %s146 = sphi 0, %s146
      %s148 = sphi 0, %s146
      %s149 = sphi 0, %s148
      %s163 = sphi 0, %s149
      %s167 = sphi 0, %s167
      %s169 = sphi 0, %s167
      %s170 = sphi 0, %s169
      %s184 = sphi 0, %s170
      %s188 = sphi 0, %s188
      %s190 = sphi 0, %s188
      %s191 = sphi 0, %s190
      %s205 = sphi 0, %s191
      %s209 = sphi 0, %s209
      %s211 = sphi 0, %s209
      %s212 = sphi 0, %s211
      %s226 = sphi 0, %s212
      %s230 = sphi 0, %s230
      %s232 = sphi 0, %s230
      %s233 = sphi 0, %s232
      %s247 = sphi 0, %s233
      %s251 = sphi 0, %s251
      %s253 = sphi 0, %s251
      %s254 = sphi 0, %s253
      %s268 = sphi 0, %s254
      %s272 = sphi 0, %s272
      %s274 = sphi 0, %s272
      %s275 = sphi 0, %s274
      %s289 = sphi 0, %s275
      %s293 = sphi 0, %s293
      %s295 = sphi 0, %s293
      %s296 = sphi 0, %s295
      %s310 = sphi 0, %s296
      %s314 = sphi 0, %s314
      %s316 = sphi 0, %s314
      %s317 = sphi 0, %s316
      %s331 = sphi 0, %s317
      %s337 = sphi 0, %s339
      %s340 = sphi 0, %s337
      %s341 = sphi 0, %s340
      %s357 = sphi 0, %s341
    $region4: #{tpu_custom_call.1} parent=1 // loop_header_branch
      %31 = sbr.rel (%p29) target = $region8
    $region5: #{tpu_custom_call.1} parent=1 // loop_body
      %s33 = ssub.s32 %s28, 1
      %s34 = ssub.s32 %s28, 2
      %s35 = sadd.s32 %s28, 1
      %s37 = sadd.s32 %s36, 1
      %p40 = scmp.eq.s32.totalorder %s28, 1
      %p41 = scmp.ne.s32.totalorder %s36, %s38
      %p42 = scmp.eq.s32.totalorder %s28, 0
      %p43 = por %p41, %p42
      %p44 = scmp.ne.s32.totalorder %s36, %s38
      %p45 = scmp.eq.s32.totalorder %s33, 1
      %p46 = por %p44, %p45
      %p47 = scmp.ne.s32.totalorder %s38, %s39
      %p48 = scmp.eq.s32.totalorder %s33, 0
      %p49 = por %p47, %p48
      %p50 = scmp.ne.s32.totalorder %s38, %s39
      %p51 = scmp.eq.s32.totalorder %s34, 1
      %p52 = por %p50, %p51
      %p54 = scmp.ne.s32.totalorder %s39, %s53
      %p55 = scmp.eq.s32.totalorder %s34, 0
      %p56 = por %p54, %p55
      %s58 = sadd.s32 %s57, 1
      %p61 = scmp.eq.s32.totalorder %s28, 1
      %p62 = scmp.ne.s32.totalorder %s57, %s59
      %p63 = scmp.eq.s32.totalorder %s28, 0
      %p64 = por %p62, %p63
      %p65 = scmp.ne.s32.totalorder %s57, %s59
      %p66 = scmp.eq.s32.totalorder %s33, 1
      %p67 = por %p65, %p66
      %p68 = scmp.ne.s32.totalorder %s59, %s60
      %p69 = scmp.eq.s32.totalorder %s33, 0
      %p70 = por %p68, %p69
      %p71 = scmp.ne.s32.totalorder %s59, %s60
      %p72 = scmp.eq.s32.totalorder %s34, 1
      %p73 = por %p71, %p72
      %p75 = scmp.ne.s32.totalorder %s60, %s74
      %p76 = scmp.eq.s32.totalorder %s34, 0
      %p77 = por %p75, %p76
      %s78 = ssub.s32 %s28, %s35
      %p79 = scmp.eq.s32.totalorder %s78, 0
      %s81 = sadd.s32 %s80, 1
      %s82 = scalar_select %p79, %s80, %s81
      %p85 = pneg %p79
      %p86 = scmp.eq.s32.totalorder %s28, 1
      %p87 = por %p85, %p86
      %p88 = scmp.ne.s32.totalorder %s80, %s83
      %p89 = scmp.eq.s32.totalorder %s28, 0
      %p90 = por %p88, %p89
      %p91 = scmp.ne.s32.totalorder %s80, %s83
      %p92 = scmp.eq.s32.totalorder %s33, 1
      %p93 = por %p91, %p92
      %p94 = scmp.ne.s32.totalorder %s83, %s84
      %p95 = scmp.eq.s32.totalorder %s33, 0
      %p96 = por %p94, %p95
      %p97 = scmp.ne.s32.totalorder %s83, %s84
      %p98 = scmp.eq.s32.totalorder %s34, 1
      %p99 = por %p97, %p98
      %p101 = scmp.ne.s32.totalorder %s84, %s100
      %p102 = scmp.eq.s32.totalorder %s34, 0
      %p103 = por %p101, %p102
      %s105 = sadd.s32 %s104, 1
      %p108 = scmp.eq.s32.totalorder %s28, 1
      %p109 = scmp.ne.s32.totalorder %s104, %s106
      %p110 = scmp.eq.s32.totalorder %s28, 0
      %p111 = por %p109, %p110
      %p112 = scmp.ne.s32.totalorder %s104, %s106
      %p113 = scmp.eq.s32.totalorder %s33, 1
      %p114 = por %p112, %p113
      %p115 = scmp.ne.s32.totalorder %s106, %s107
      %p116 = scmp.eq.s32.totalorder %s33, 0
      %p117 = por %p115, %p116
      %p118 = scmp.ne.s32.totalorder %s106, %s107
      %p119 = scmp.eq.s32.totalorder %s34, 1
      %p120 = por %p118, %p119
      %p122 = scmp.ne.s32.totalorder %s107, %s121
      %p123 = scmp.eq.s32.totalorder %s34, 0
      %p124 = por %p122, %p123
      %s126 = sadd.s32 %s125, 1
      %p129 = scmp.eq.s32.totalorder %s28, 1
      %p130 = scmp.ne.s32.totalorder %s125, %s127
      %p131 = scmp.eq.s32.totalorder %s28, 0
      %p132 = por %p130, %p131
      %p133 = scmp.ne.s32.totalorder %s125, %s127
      %p134 = scmp.eq.s32.totalorder %s33, 1
      %p135 = por %p133, %p134
      %p136 = scmp.ne.s32.totalorder %s127, %s128
      %p137 = scmp.eq.s32.totalorder %s33, 0
      %p138 = por %p136, %p137
      %p139 = scmp.ne.s32.totalorder %s127, %s128
      %p140 = scmp.eq.s32.totalorder %s34, 1
      %p141 = por %p139, %p140
      %p143 = scmp.ne.s32.totalorder %s128, %s142
      %p144 = scmp.eq.s32.totalorder %s34, 0
      %p145 = por %p143, %p144
      %s147 = sadd.s32 %s146, 1
      %p150 = scmp.eq.s32.totalorder %s28, 1
      %p151 = scmp.ne.s32.totalorder %s146, %s148
      %p152 = scmp.eq.s32.totalorder %s28, 0
      %p153 = por %p151, %p152
      %p154 = scmp.ne.s32.totalorder %s146, %s148
      %p155 = scmp.eq.s32.totalorder %s33, 1
      %p156 = por %p154, %p155
      %p157 = scmp.ne.s32.totalorder %s148, %s149
      %p158 = scmp.eq.s32.totalorder %s33, 0
      %p159 = por %p157, %p158
      %p160 = scmp.ne.s32.totalorder %s148, %s149
      %p161 = scmp.eq.s32.totalorder %s34, 1
      %p162 = por %p160, %p161
      %p164 = scmp.ne.s32.totalorder %s149, %s163
      %p165 = scmp.eq.s32.totalorder %s34, 0
      %p166 = por %p164, %p165
      %s168 = sadd.s32 %s167, 1
      %p171 = scmp.eq.s32.totalorder %s28, 1
      %p172 = scmp.ne.s32.totalorder %s167, %s169
      %p173 = scmp.eq.s32.totalorder %s28, 0
      %p174 = por %p172, %p173
      %p175 = scmp.ne.s32.totalorder %s167, %s169
      %p176 = scmp.eq.s32.totalorder %s33, 1
      %p177 = por %p175, %p176
      %p178 = scmp.ne.s32.totalorder %s169, %s170
      %p179 = scmp.eq.s32.totalorder %s33, 0
      %p180 = por %p178, %p179
      %p181 = scmp.ne.s32.totalorder %s169, %s170
      %p182 = scmp.eq.s32.totalorder %s34, 1
      %p183 = por %p181, %p182
      %p185 = scmp.ne.s32.totalorder %s170, %s184
      %p186 = scmp.eq.s32.totalorder %s34, 0
      %p187 = por %p185, %p186
      %s189 = sadd.s32 %s188, 1
      %p192 = scmp.eq.s32.totalorder %s28, 1
      %p193 = scmp.ne.s32.totalorder %s188, %s190
      %p194 = scmp.eq.s32.totalorder %s28, 0
      %p195 = por %p193, %p194
      %p196 = scmp.ne.s32.totalorder %s188, %s190
      %p197 = scmp.eq.s32.totalorder %s33, 1
      %p198 = por %p196, %p197
      %p199 = scmp.ne.s32.totalorder %s190, %s191
      %p200 = scmp.eq.s32.totalorder %s33, 0
      %p201 = por %p199, %p200
      %p202 = scmp.ne.s32.totalorder %s190, %s191
      %p203 = scmp.eq.s32.totalorder %s34, 1
      %p204 = por %p202, %p203
      %p206 = scmp.ne.s32.totalorder %s191, %s205
      %p207 = scmp.eq.s32.totalorder %s34, 0
      %p208 = por %p206, %p207
      %s210 = sadd.s32 %s209, 1
      %p213 = scmp.eq.s32.totalorder %s28, 1
      %p214 = scmp.ne.s32.totalorder %s209, %s211
      %p215 = scmp.eq.s32.totalorder %s28, 0
      %p216 = por %p214, %p215
      %p217 = scmp.ne.s32.totalorder %s209, %s211
      %p218 = scmp.eq.s32.totalorder %s33, 1
      %p219 = por %p217, %p218
      %p220 = scmp.ne.s32.totalorder %s211, %s212
      %p221 = scmp.eq.s32.totalorder %s33, 0
      %p222 = por %p220, %p221
      %p223 = scmp.ne.s32.totalorder %s211, %s212
      %p224 = scmp.eq.s32.totalorder %s34, 1
      %p225 = por %p223, %p224
      %p227 = scmp.ne.s32.totalorder %s212, %s226
      %p228 = scmp.eq.s32.totalorder %s34, 0
      %p229 = por %p227, %p228
      %s231 = sadd.s32 %s230, 1
      %p234 = scmp.eq.s32.totalorder %s28, 1
      %p235 = scmp.ne.s32.totalorder %s230, %s232
      %p236 = scmp.eq.s32.totalorder %s28, 0
      %p237 = por %p235, %p236
      %p238 = scmp.ne.s32.totalorder %s230, %s232
      %p239 = scmp.eq.s32.totalorder %s33, 1
      %p240 = por %p238, %p239
      %p241 = scmp.ne.s32.totalorder %s232, %s233
      %p242 = scmp.eq.s32.totalorder %s33, 0
      %p243 = por %p241, %p242
      %p244 = scmp.ne.s32.totalorder %s232, %s233
      %p245 = scmp.eq.s32.totalorder %s34, 1
      %p246 = por %p244, %p245
      %p248 = scmp.ne.s32.totalorder %s233, %s247
      %p249 = scmp.eq.s32.totalorder %s34, 0
      %p250 = por %p248, %p249
      %s252 = sadd.s32 %s251, 1
      %p255 = scmp.eq.s32.totalorder %s28, 1
      %p256 = scmp.ne.s32.totalorder %s251, %s253
      %p257 = scmp.eq.s32.totalorder %s28, 0
      %p258 = por %p256, %p257
      %p259 = scmp.ne.s32.totalorder %s251, %s253
      %p260 = scmp.eq.s32.totalorder %s33, 1
      %p261 = por %p259, %p260
      %p262 = scmp.ne.s32.totalorder %s253, %s254
      %p263 = scmp.eq.s32.totalorder %s33, 0
      %p264 = por %p262, %p263
      %p265 = scmp.ne.s32.totalorder %s253, %s254
      %p266 = scmp.eq.s32.totalorder %s34, 1
      %p267 = por %p265, %p266
      %p269 = scmp.ne.s32.totalorder %s254, %s268
      %p270 = scmp.eq.s32.totalorder %s34, 0
      %p271 = por %p269, %p270
      %s273 = sadd.s32 %s272, 1
      %p276 = scmp.eq.s32.totalorder %s28, 1
      %p277 = scmp.ne.s32.totalorder %s272, %s274
      %p278 = scmp.eq.s32.totalorder %s28, 0
      %p279 = por %p277, %p278
      %p280 = scmp.ne.s32.totalorder %s272, %s274
      %p281 = scmp.eq.s32.totalorder %s33, 1
      %p282 = por %p280, %p281
      %p283 = scmp.ne.s32.totalorder %s274, %s275
      %p284 = scmp.eq.s32.totalorder %s33, 0
      %p285 = por %p283, %p284
      %p286 = scmp.ne.s32.totalorder %s274, %s275
      %p287 = scmp.eq.s32.totalorder %s34, 1
      %p288 = por %p286, %p287
      %p290 = scmp.ne.s32.totalorder %s275, %s289
      %p291 = scmp.eq.s32.totalorder %s34, 0
      %p292 = por %p290, %p291
      %s294 = sadd.s32 %s293, 1
      %p297 = scmp.eq.s32.totalorder %s28, 1
      %p298 = scmp.ne.s32.totalorder %s293, %s295
      %p299 = scmp.eq.s32.totalorder %s28, 0
      %p300 = por %p298, %p299
      %p301 = scmp.ne.s32.totalorder %s293, %s295
      %p302 = scmp.eq.s32.totalorder %s33, 1
      %p303 = por %p301, %p302
      %p304 = scmp.ne.s32.totalorder %s295, %s296
      %p305 = scmp.eq.s32.totalorder %s33, 0
      %p306 = por %p304, %p305
      %p307 = scmp.ne.s32.totalorder %s295, %s296
      %p308 = scmp.eq.s32.totalorder %s34, 1
      %p309 = por %p307, %p308
      %p311 = scmp.ne.s32.totalorder %s296, %s310
      %p312 = scmp.eq.s32.totalorder %s34, 0
      %p313 = por %p311, %p312
      %s315 = sadd.s32 %s314, 1
      %p318 = scmp.eq.s32.totalorder %s28, 1
      %p319 = scmp.ne.s32.totalorder %s314, %s316
      %p320 = scmp.eq.s32.totalorder %s28, 0
      %p321 = por %p319, %p320
      %p322 = scmp.ne.s32.totalorder %s314, %s316
      %p323 = scmp.eq.s32.totalorder %s33, 1
      %p324 = por %p322, %p323
      %p325 = scmp.ne.s32.totalorder %s316, %s317
      %p326 = scmp.eq.s32.totalorder %s33, 0
      %p327 = por %p325, %p326
      %p328 = scmp.ne.s32.totalorder %s316, %s317
      %p329 = scmp.eq.s32.totalorder %s34, 1
      %p330 = por %p328, %p329
      %p332 = scmp.ne.s32.totalorder %s317, %s331
      %p333 = scmp.eq.s32.totalorder %s34, 0
      %p334 = por %p332, %p333
      %s335 = ssub.s32 %s28, %s35
      %p336 = scmp.eq.s32.totalorder %s335, 0
      %s338 = sadd.s32 %s337, 1
      %s339 = scalar_select %p336, %s337, %s338
      %p342 = pneg %p336
      %p343 = scmp.eq.s32.totalorder %s28, 1
      %p344 = por %p342, %p343
      %p345 = scmp.ne.s32.totalorder %s337, %s340
      %p346 = scmp.eq.s32.totalorder %s28, 0
      %p347 = por %p345, %p346
      %p348 = scmp.ne.s32.totalorder %s337, %s340
      %p349 = scmp.eq.s32.totalorder %s33, 1
      %p350 = por %p348, %p349
      %p351 = scmp.ne.s32.totalorder %s340, %s341
      %p352 = scmp.eq.s32.totalorder %s33, 0
      %p353 = por %p351, %p352
      %p354 = scmp.ne.s32.totalorder %s340, %s341
      %p355 = scmp.eq.s32.totalorder %s34, 1
      %p356 = por %p354, %p355
      %p358 = scmp.ne.s32.totalorder %s341, %s357
      %p359 = scmp.eq.s32.totalorder %s34, 0
      %p360 = por %p358, %p359
      %p361 = scmp.le.s32.totalorder 1, %s28
      %p362 = scmp.lt.s32.totalorder %s28, 3
      %p363 = pnand %p361, %p362
      %p364 = pneg %p363
      // Predicated region
      $region9: #{tpu_custom_call.1} parent=5 // pred_check
        _
      $region10: #{tpu_custom_call.1} parent=5 // pred_check_branch
        %366 = sbr.rel (%p363) target = $region12
      $region11: #{tpu_custom_call.1} parent=5 // pred_region
        %s367 = ssub.s32 %s28, 1
        // Predicated region
        $region13: #{tpu_custom_call.1} parent=11 // pred_check
          %p368 = pneg %p49
        $region14: #{tpu_custom_call.1} parent=11 // pred_check_branch
          %370 = sbr.rel (%p368) target = $region16
        $region15: #{tpu_custom_call.1} parent=11 // pred_region
          %s372 = ssub.s32 16, 16
          %373 = vsyncadd [#allocation6], %s372
          %s375 = sshll.u32 %s0, 4
          %s376 = int_to_ptr.vmem [resolvable:$true] %s375
          %378 = dma.vmem_to_smem %s376, 16, [#allocation3], [#allocation6]
        $region16: #{tpu_custom_call.1} parent=11 // pred_fallthru
          _
        // Predicated region
        $region17: #{tpu_custom_call.1} parent=11 // pred_check
          %p379 = pneg %p70
        $region18: #{tpu_custom_call.1} parent=11 // pred_check_branch
          %381 = sbr.rel (%p379) target = $region20
        $region19: #{tpu_custom_call.1} parent=11 // pred_region
          _
        $region20: #{tpu_custom_call.1} parent=11 // pred_fallthru
          _
        // Predicated region
        $region21: #{tpu_custom_call.1} parent=11 // pred_check
          %p382 = pneg %p117
        $region22: #{tpu_custom_call.1} parent=11 // pred_check_branch
          %384 = sbr.rel (%p382) target = $region24
        $region23: #{tpu_custom_call.1} parent=11 // pred_region
          %s386 = ssub.s32 6144, 6144
          %387 = vsyncadd [#allocation4], %s386
          %s388 = sshll.u32 [#allocation7], 4
          %s389 = int_to_ptr.vmem [resolvable:$true] %s388
          %394 = dma.hbm_to_vmem [thread:$0]  %s3, 6144, %s389, [#allocation4], 64, 64, 4
        $region24: #{tpu_custom_call.1} parent=11 // pred_fallthru
          _
        // Predicated region
        $region25: #{tpu_custom_call.1} parent=11 // pred_check
          %p395 = pneg %p138
        $region26: #{tpu_custom_call.1} parent=11 // pred_check_branch
          %397 = sbr.rel (%p395) target = $region28
        $region27: #{tpu_custom_call.1} parent=11 // pred_region
          _
        $region28: #{tpu_custom_call.1} parent=11 // pred_fallthru
          _
        // Predicated region
        $region29: #{tpu_custom_call.1} parent=11 // pred_check
          %p398 = pneg %p159
        $region30: #{tpu_custom_call.1} parent=11 // pred_check_branch
          %400 = sbr.rel (%p398) target = $region32
        $region31: #{tpu_custom_call.1} parent=11 // pred_region
          %s402 = ssub.s32 1024, 1024
          %403 = vsyncadd [#allocation9], %s402
          %s404 = sshll.u32 [#allocation8], 4
          %s405 = int_to_ptr.vmem [resolvable:$true] %s404
          %410 = dma.hbm_to_vmem [thread:$0]  %s5, 1024, %s405, [#allocation9], 64, 64, 4
        $region32: #{tpu_custom_call.1} parent=11 // pred_fallthru
          _
        // Predicated region
        $region33: #{tpu_custom_call.1} parent=11 // pred_check
          %p411 = pneg %p180
        $region34: #{tpu_custom_call.1} parent=11 // pred_check_branch
          %413 = sbr.rel (%p411) target = $region36
        $region35: #{tpu_custom_call.1} parent=11 // pred_region
          _
        $region36: #{tpu_custom_call.1} parent=11 // pred_fallthru
          _
        // Predicated region
        $region37: #{tpu_custom_call.1} parent=11 // pred_check
          %p414 = pneg %p201
        $region38: #{tpu_custom_call.1} parent=11 // pred_check_branch
          %416 = sbr.rel (%p414) target = $region40
        $region39: #{tpu_custom_call.1} parent=11 // pred_region
          %s418 = ssub.s32 1024, 1024
          %419 = vsyncadd [#allocation9], %s418
          %s420 = sshll.u32 [#allocation10], 4
          %s421 = int_to_ptr.vmem [resolvable:$true] %s420
          %426 = dma.hbm_to_vmem [thread:$0]  %s7, 1024, %s421, [#allocation9], 64, 64, 4
        $region40: #{tpu_custom_call.1} parent=11 // pred_fallthru
          _
        // Predicated region
        $region41: #{tpu_custom_call.1} parent=11 // pred_check
          %p427 = pneg %p222
        $region42: #{tpu_custom_call.1} parent=11 // pred_check_branch
          %429 = sbr.rel (%p427) target = $region44
        $region43: #{tpu_custom_call.1} parent=11 // pred_region
          _
        $region44: #{tpu_custom_call.1} parent=11 // pred_fallthru
          _
        // Predicated region
        $region45: #{tpu_custom_call.1} parent=11 // pred_check
          %p430 = pneg %p243
        $region46: #{tpu_custom_call.1} parent=11 // pred_check_branch
          %432 = sbr.rel (%p430) target = $region48
        $region47: #{tpu_custom_call.1} parent=11 // pred_region
          %s434 = ssub.s32 1024, 1024
          %435 = vsyncadd [#allocation12], %s434
          %s436 = sshll.u32 [#allocation11], 4
          %s437 = int_to_ptr.vmem [resolvable:$true] %s436
          %442 = dma.hbm_to_vmem [thread:$0]  %s9, 1024, %s437, [#allocation12], 64, 64, 4
        $region48: #{tpu_custom_call.1} parent=11 // pred_fallthru
          _
        // Predicated region
        $region49: #{tpu_custom_call.1} parent=11 // pred_check
          %p443 = pneg %p264
        $region50: #{tpu_custom_call.1} parent=11 // pred_check_branch
          %445 = sbr.rel (%p443) target = $region52
        $region51: #{tpu_custom_call.1} parent=11 // pred_region
          _
        $region52: #{tpu_custom_call.1} parent=11 // pred_fallthru
          _
        // Predicated region
        $region53: #{tpu_custom_call.1} parent=11 // pred_check
          %p446 = pneg %p285
        $region54: #{tpu_custom_call.1} parent=11 // pred_check_branch
          %448 = sbr.rel (%p446) target = $region56
        $region55: #{tpu_custom_call.1} parent=11 // pred_region
          _
        $region56: #{tpu_custom_call.1} parent=11 // pred_fallthru
          _
        // Predicated region
        $region57: #{tpu_custom_call.1} parent=11 // pred_check
          %p449 = pneg %p306
        $region58: #{tpu_custom_call.1} parent=11 // pred_check_branch
          %451 = sbr.rel (%p449) target = $region60
        $region59: #{tpu_custom_call.1} parent=11 // pred_region
          _
        $region60: #{tpu_custom_call.1} parent=11 // pred_fallthru
          _
        // Predicated region
        $region61: #{tpu_custom_call.1} parent=11 // pred_check
          %p452 = pneg %p327
        $region62: #{tpu_custom_call.1} parent=11 // pred_check_branch
          %454 = sbr.rel (%p452) target = $region64
        $region63: #{tpu_custom_call.1} parent=11 // pred_region
          _
        $region64: #{tpu_custom_call.1} parent=11 // pred_fallthru
          _
      $region12: #{tpu_custom_call.1} parent=5 // pred_fallthru
        _
      %p455 = scmp.lt.s32.totalorder %s28, 2
      // Predicated region
      $region65: #{tpu_custom_call.1} parent=5 // pred_check
        %p456 = pneg %p455
      $region66: #{tpu_custom_call.1} parent=5 // pred_check_branch
        %458 = sbr.rel (%p456) target = $region68
      $region67: #{tpu_custom_call.1} parent=5 // pred_region
        // Predicated region
        $region69: #{tpu_custom_call.1} parent=67 // pred_check
          %p459 = pneg %p90
        $region70: #{tpu_custom_call.1} parent=67 // pred_check_branch
          %461 = sbr.rel (%p459) target = $region72
        $region71: #{tpu_custom_call.1} parent=67 // pred_region
          %s462 = smul.u32 2, %s28
          %s463 = ssub.s32 3, %s462
          %p464 = scmp.lt.s32.totalorder %s463, 2
          %s465 = scalar_select %p464, %s463, 2
          %s466 = smul.u32 64, %s465
          %s467 = smul.u32 %s466, 6
          %p468 = scmp.lt.s32.totalorder %s462, 2
          %s469 = scalar_select %p468, %s462, 2
          %s470 = smul.addr %s469, 6
          %s471 = smul.addr %s470, 4
          %s472 = scalar_lea.vmem %s2, %s471
          %s473 = smul.u32 2, %s28
          %s474 = ssub.s32 3, %s473
          %p475 = scmp.lt.s32.totalorder %s474, 2
          %s476 = scalar_select %p475, %s474, 2
          %s477 = smul.u32 64, %s476
          %s478 = smul.u32 %s477, 6
        $region72: #{tpu_custom_call.1} parent=67 // pred_fallthru
          _
      $region68: #{tpu_custom_call.1} parent=5 // pred_fallthru
        _
      %p479 = scmp.le.s32.totalorder 1, %s28
      %p480 = scmp.lt.s32.totalorder %s28, 3
      %p481 = pnand %p479, %p480
      %p482 = pneg %p481
      // Predicated region
      $region73: #{tpu_custom_call.1} parent=5 // pred_check
        _
      $region74: #{tpu_custom_call.1} parent=5 // pred_check_branch
        %484 = sbr.rel (%p481) target = $region76
      $region75: #{tpu_custom_call.1} parent=5 // pred_region
        %s485 = ssub.s32 %s28, 1
        // Predicated region
        $region77: #{tpu_custom_call.1} parent=75 // pred_check
          %p486 = pneg %p49
        $region78: #{tpu_custom_call.1} parent=75 // pred_check_branch
          %488 = sbr.rel (%p486) target = $region80
        $region79: #{tpu_custom_call.1} parent=75 // pred_region
          %489 = dma.done [#allocation6], 16
        $region80: #{tpu_custom_call.1} parent=75 // pred_fallthru
          _
        // Predicated region
        $region81: #{tpu_custom_call.1} parent=75 // pred_check
          %p490 = pneg %p117
        $region82: #{tpu_custom_call.1} parent=75 // pred_check_branch
          %492 = sbr.rel (%p490) target = $region84
        $region83: #{tpu_custom_call.1} parent=75 // pred_region
          %493 = dma.done [#allocation4], 6144
        $region84: #{tpu_custom_call.1} parent=75 // pred_fallthru
          _
        // Predicated region
        $region85: #{tpu_custom_call.1} parent=75 // pred_check
          %p494 = pneg %p159
        $region86: #{tpu_custom_call.1} parent=75 // pred_check_branch
          %496 = sbr.rel (%p494) target = $region88
        $region87: #{tpu_custom_call.1} parent=75 // pred_region
          %497 = dma.done [#allocation9], 1024
        $region88: #{tpu_custom_call.1} parent=75 // pred_fallthru
          _
        // Predicated region
        $region89: #{tpu_custom_call.1} parent=75 // pred_check
          %p498 = pneg %p201
        $region90: #{tpu_custom_call.1} parent=75 // pred_check_branch
          %500 = sbr.rel (%p498) target = $region92
        $region91: #{tpu_custom_call.1} parent=75 // pred_region
          %501 = dma.done [#allocation9], 1024
        $region92: #{tpu_custom_call.1} parent=75 // pred_fallthru
          _
        // Predicated region
        $region93: #{tpu_custom_call.1} parent=75 // pred_check
          %p502 = pneg %p243
        $region94: #{tpu_custom_call.1} parent=75 // pred_check_branch
          %504 = sbr.rel (%p502) target = $region96
        $region95: #{tpu_custom_call.1} parent=75 // pred_region
          %505 = dma.done [#allocation12], 1024
        $region96: #{tpu_custom_call.1} parent=75 // pred_fallthru
          _
        %506 = sfence
        %p507 = pneg %p49
        %p508 = pneg %p46
        %p509 = pneg %p70
        %p510 = pneg %p67
        %s511 = smul.u32 2, %s33
        %s512 = ssub.s32 3, %s511
        %p513 = scmp.lt.s32.totalorder %s512, 2
        %s514 = scalar_select %p513, %s512, 2
        %s515 = smul.u32 64, %s514
        %s516 = smul.u32 %s515, 6
        %p517 = scmp.lt.s32.totalorder %s511, 2
        %s518 = scalar_select %p517, %s511, 2
        %s519 = smul.addr %s518, 6
        %s520 = smul.addr %s519, 4
        %s521 = scalar_lea.vmem %s2, %s520
        %p522 = pneg %p96
        %p523 = pneg %p93
        %p524 = pneg %p117
        %p525 = pneg %p114
        %p526 = pneg %p138
        %p527 = pneg %p135
        %p528 = pneg %p159
        %p529 = pneg %p156
        %p530 = pneg %p180
        %p531 = pneg %p177
        %p532 = pneg %p201
        %p533 = pneg %p198
        %p534 = pneg %p222
        %p535 = pneg %p219
        %p536 = pneg %p243
        %p537 = pneg %p240
        %p538 = pneg %p264
        %p539 = pneg %p261
        %p540 = pneg %p285
        %p541 = pneg %p282
        %p542 = pneg %p306
        %p543 = pneg %p303
        %p544 = pneg %p327
        %p545 = pneg %p324
        %p546 = pneg %p353
        %p547 = pneg %p350
        %s548 = sand.u32 %s340, 1
        %s549 = scalar_lea.sflag [#allocation5], %s548
        %s550 = sand.u32 %s340, 1
        %s551 = scalar_lea.vmem [#allocation13], %s550
        %s552 = smul.u32 2, %s33
        %s553 = ssub.s32 3, %s552
        %p554 = scmp.lt.s32.totalorder %s553, 2
        %s555 = scalar_select %p554, %s553, 2
        %s556 = smul.u32 64, %s555
        %s557 = smul.u32 %s556, 6
        %p558 = scmp.lt.s32.totalorder %s552, 2
        %s559 = scalar_select %p558, %s552, 2
        %s560 = smul.addr %s559, 6
        %s561 = smul.addr %s560, 4
        %s562 = scalar_lea.vmem %s2, %s561
        %s563 = smul.u32 2, %s33
        %s564 = ssub.s32 3, %s563
        %p565 = scmp.lt.s32.totalorder %s564, 2
        %s566 = scalar_select %p565, %s564, 2
        %s567 = smul.u32 64, %s566
        %s568 = smul.u32 %s567, 6
        %v570 = vld [vmem:[%s562] sm:$0xff]
        %v571 = vld [vmem:[%s562 + $0x8] sm:$0xff]
        %v572 = vld [vmem:[%s562 + $0x10] sm:$0xff]
        %v573 = vld [vmem:[%s562 + $0x18] sm:$0xff]
        %v574 = vld [vmem:[%s562 + $0x20] sm:$0xff]
        %v575 = vld [vmem:[%s562 + $0x28] sm:$0xff]
        %v576 = vld [vmem:[#allocation7] sm:$0xf]
        %v577 = vld [vmem:[#allocation7 + $0x4] sm:$0xf]
        %v578 = vld [vmem:[#allocation7 + $0x8] sm:$0xf]
        %v579 = vld [vmem:[#allocation7 + $0xc] sm:$0xf]
        %v580 = vld [vmem:[#allocation7 + $0x10] sm:$0xf]
        %v581 = vld [vmem:[#allocation7 + $0x14] sm:$0xf]
        %v582 = vld [vmem:[#allocation7 + $0x18] sm:$0xf]
        %v583 = vld [vmem:[#allocation7 + $0x1c] sm:$0xf]
        %v584 = vld [vmem:[#allocation7 + $0x20] sm:$0xf]
        %v585 = vld [vmem:[#allocation7 + $0x24] sm:$0xf]
        %v586 = vld [vmem:[#allocation7 + $0x28] sm:$0xf]
        %v587 = vld [vmem:[#allocation7 + $0x2c] sm:$0xf]
        %v588 = vld [vmem:[#allocation7 + $0x30] sm:$0xf]
        %v589 = vld [vmem:[#allocation7 + $0x34] sm:$0xf]
        %v590 = vld [vmem:[#allocation7 + $0x38] sm:$0xf]
        %v591 = vld [vmem:[#allocation7 + $0x3c] sm:$0xf]
        %v592 = vld [vmem:[#allocation7 + $0x40] sm:$0xf]
        %v593 = vld [vmem:[#allocation7 + $0x44] sm:$0xf]
        %v594 = vld [vmem:[#allocation7 + $0x48] sm:$0xf]
        %v595 = vld [vmem:[#allocation7 + $0x4c] sm:$0xf]
        %v596 = vld [vmem:[#allocation7 + $0x50] sm:$0xf]
        %v597 = vld [vmem:[#allocation7 + $0x54] sm:$0xf]
        %v598 = vld [vmem:[#allocation7 + $0x58] sm:$0xf]
        %v599 = vld [vmem:[#allocation7 + $0x5c] sm:$0xf]
        %v600 = vld [vmem:[#allocation7 + $0x60] sm:$0xf]
        %v601 = vld [vmem:[#allocation7 + $0x64] sm:$0xf]
        %v602 = vld [vmem:[#allocation7 + $0x68] sm:$0xf]
        %v603 = vld [vmem:[#allocation7 + $0x6c] sm:$0xf]
        %v604 = vld [vmem:[#allocation7 + $0x70] sm:$0xf]
        %v605 = vld [vmem:[#allocation7 + $0x74] sm:$0xf]
        %v606 = vld [vmem:[#allocation7 + $0x78] sm:$0xf]
        %v607 = vld [vmem:[#allocation7 + $0x7c] sm:$0xf]
        %v608 = vld [vmem:[#allocation7 + $0x80] sm:$0xf]
        %v609 = vld [vmem:[#allocation7 + $0x84] sm:$0xf]
        %v610 = vld [vmem:[#allocation7 + $0x88] sm:$0xf]
        %v611 = vld [vmem:[#allocation7 + $0x8c] sm:$0xf]
        %v612 = vld [vmem:[#allocation7 + $0x90] sm:$0xf]
        %v613 = vld [vmem:[#allocation7 + $0x94] sm:$0xf]
        %v614 = vld [vmem:[#allocation7 + $0x98] sm:$0xf]
        %v615 = vld [vmem:[#allocation7 + $0x9c] sm:$0xf]
        %v616 = vld [vmem:[#allocation7 + $0xa0] sm:$0xf]
        %v617 = vld [vmem:[#allocation7 + $0xa4] sm:$0xf]
        %v618 = vld [vmem:[#allocation7 + $0xa8] sm:$0xf]
        %v619 = vld [vmem:[#allocation7 + $0xac] sm:$0xf]
        %v620 = vld [vmem:[#allocation7 + $0xb0] sm:$0xf]
        %v621 = vld [vmem:[#allocation7 + $0xb4] sm:$0xf]
        %v622 = vld [vmem:[#allocation7 + $0xb8] sm:$0xf]
        %v623 = vld [vmem:[#allocation7 + $0xbc] sm:$0xf]
        %v624 = vld [vmem:[#allocation7 + $0xc0] sm:$0xf]
        %v625 = vld [vmem:[#allocation7 + $0xc4] sm:$0xf]
        %v626 = vld [vmem:[#allocation7 + $0xc8] sm:$0xf]
        %v627 = vld [vmem:[#allocation7 + $0xcc] sm:$0xf]
        %v628 = vld [vmem:[#allocation7 + $0xd0] sm:$0xf]
        %v629 = vld [vmem:[#allocation7 + $0xd4] sm:$0xf]
        %v630 = vld [vmem:[#allocation7 + $0xd8] sm:$0xf]
        %v631 = vld [vmem:[#allocation7 + $0xdc] sm:$0xf]
        %v632 = vld [vmem:[#allocation7 + $0xe0] sm:$0xf]
        %v633 = vld [vmem:[#allocation7 + $0xe4] sm:$0xf]
        %v634 = vld [vmem:[#allocation7 + $0xe8] sm:$0xf]
        %v635 = vld [vmem:[#allocation7 + $0xec] sm:$0xf]
        %v636 = vld [vmem:[#allocation7 + $0xf0] sm:$0xf]
        %v637 = vld [vmem:[#allocation7 + $0xf4] sm:$0xf]
        %v638 = vld [vmem:[#allocation7 + $0xf8] sm:$0xf]
        %v639 = vld [vmem:[#allocation7 + $0xfc] sm:$0xf]
        %v640 = vld [vmem:[#allocation7 + $0x100] sm:$0xf]
        %v641 = vld [vmem:[#allocation7 + $0x104] sm:$0xf]
        %v642 = vld [vmem:[#allocation7 + $0x108] sm:$0xf]
        %v643 = vld [vmem:[#allocation7 + $0x10c] sm:$0xf]
        %v644 = vld [vmem:[#allocation7 + $0x110] sm:$0xf]
        %v645 = vld [vmem:[#allocation7 + $0x114] sm:$0xf]
        %v646 = vld [vmem:[#allocation7 + $0x118] sm:$0xf]
        %v647 = vld [vmem:[#allocation7 + $0x11c] sm:$0xf]
        %v648 = vld [vmem:[#allocation7 + $0x120] sm:$0xf]
        %v649 = vld [vmem:[#allocation7 + $0x124] sm:$0xf]
        %v650 = vld [vmem:[#allocation7 + $0x128] sm:$0xf]
        %v651 = vld [vmem:[#allocation7 + $0x12c] sm:$0xf]
        %v652 = vld [vmem:[#allocation7 + $0x130] sm:$0xf]
        %v653 = vld [vmem:[#allocation7 + $0x134] sm:$0xf]
        %v654 = vld [vmem:[#allocation7 + $0x138] sm:$0xf]
        %v655 = vld [vmem:[#allocation7 + $0x13c] sm:$0xf]
        %v656 = vld [vmem:[#allocation7 + $0x140] sm:$0xf]
        %v657 = vld [vmem:[#allocation7 + $0x144] sm:$0xf]
        %v658 = vld [vmem:[#allocation7 + $0x148] sm:$0xf]
        %v659 = vld [vmem:[#allocation7 + $0x14c] sm:$0xf]
        %v660 = vld [vmem:[#allocation7 + $0x150] sm:$0xf]
        %v661 = vld [vmem:[#allocation7 + $0x154] sm:$0xf]
        %v662 = vld [vmem:[#allocation7 + $0x158] sm:$0xf]
        %v663 = vld [vmem:[#allocation7 + $0x15c] sm:$0xf]
        %v664 = vld [vmem:[#allocation7 + $0x160] sm:$0xf]
        %v665 = vld [vmem:[#allocation7 + $0x164] sm:$0xf]
        %v666 = vld [vmem:[#allocation7 + $0x168] sm:$0xf]
        %v667 = vld [vmem:[#allocation7 + $0x16c] sm:$0xf]
        %v668 = vld [vmem:[#allocation7 + $0x170] sm:$0xf]
        %v669 = vld [vmem:[#allocation7 + $0x174] sm:$0xf]
        %v670 = vld [vmem:[#allocation7 + $0x178] sm:$0xf]
        %v671 = vld [vmem:[#allocation7 + $0x17c] sm:$0xf]
        %v672 = vld [vmem:[%s4] sm:$0x1]
        %v674 = vlaneseq
        %v675 = vshrl.u32 %v674, 7
        %v676 = vsub.s32 0, %v675
        %v677 = vrot.slane %v672, %v676
        %v685 = vunpack.c.l.b16 %v570
        %v686 = vunpack.c.h.b16 %v570
        %v687 = vunpack.c.l.b16 %v571
        %v688 = vunpack.c.h.b16 %v571
        %v689 = vunpack.c.l.b16 %v572
        %v690 = vunpack.c.h.b16 %v572
        %v691 = vunpack.c.l.b16 %v573
        %v692 = vunpack.c.h.b16 %v573
        %v693 = vunpack.c.l.b16 %v574
        %v694 = vunpack.c.h.b16 %v574
        %v695 = vunpack.c.l.b16 %v575
        %v696 = vunpack.c.h.b16 %v575
        %v697 = vpack.c.b16 %v691, %v685
        %v698 = vpack.c.b16 %v692, %v686
        %v699 = vpack.c.b16 %v693, %v687
        %v700 = vpack.c.b16 %v694, %v688
        %v701 = vpack.c.b16 %v695, %v689
        %v702 = vpack.c.b16 %v696, %v690
        %v805 = vunpack.c.l.b16 %v576
        %v806 = vunpack.c.l.b16 %v577
        %v807 = vunpack.c.l.b16 %v578
        %v808 = vunpack.c.l.b16 %v579
        %v809 = vunpack.c.l.b16 %v580
        %v810 = vunpack.c.l.b16 %v581
        %v811 = vunpack.c.l.b16 %v582
        %v812 = vunpack.c.l.b16 %v583
        %v813 = vunpack.c.l.b16 %v584
        %v814 = vunpack.c.l.b16 %v585
        %v815 = vunpack.c.l.b16 %v586
        %v816 = vunpack.c.l.b16 %v587
        %v817 = vunpack.c.l.b16 %v588
        %v818 = vunpack.c.l.b16 %v589
        %v819 = vunpack.c.l.b16 %v590
        %v820 = vunpack.c.l.b16 %v591
        %v821 = vunpack.c.l.b16 %v592
        %v822 = vunpack.c.l.b16 %v593
        %v823 = vunpack.c.l.b16 %v594
        %v824 = vunpack.c.l.b16 %v595
        %v825 = vunpack.c.l.b16 %v596
        %v826 = vunpack.c.l.b16 %v597
        %v827 = vunpack.c.l.b16 %v598
        %v828 = vunpack.c.l.b16 %v599
        %v829 = vunpack.c.l.b16 %v600
        %v830 = vunpack.c.l.b16 %v601
        %v831 = vunpack.c.l.b16 %v602
        %v832 = vunpack.c.l.b16 %v603
        %v833 = vunpack.c.l.b16 %v604
        %v834 = vunpack.c.l.b16 %v605
        %v835 = vunpack.c.l.b16 %v606
        %v836 = vunpack.c.l.b16 %v607
        %v837 = vunpack.c.l.b16 %v608
        %v838 = vunpack.c.l.b16 %v609
        %v839 = vunpack.c.l.b16 %v610
        %v840 = vunpack.c.l.b16 %v611
        %v841 = vunpack.c.l.b16 %v612
        %v842 = vunpack.c.l.b16 %v613
        %v843 = vunpack.c.l.b16 %v614
        %v844 = vunpack.c.l.b16 %v615
        %v845 = vunpack.c.l.b16 %v616
        %v846 = vunpack.c.l.b16 %v617
        %v847 = vunpack.c.l.b16 %v618
        %v848 = vunpack.c.l.b16 %v619
        %v849 = vunpack.c.l.b16 %v620
        %v850 = vunpack.c.l.b16 %v621
        %v851 = vunpack.c.l.b16 %v622
        %v852 = vunpack.c.l.b16 %v623
        %v853 = vunpack.c.l.b16 %v624
        %v854 = vunpack.c.l.b16 %v625
        %v855 = vunpack.c.l.b16 %v626
        %v856 = vunpack.c.l.b16 %v627
        %v857 = vunpack.c.l.b16 %v628
        %v858 = vunpack.c.l.b16 %v629
        %v859 = vunpack.c.l.b16 %v630
        %v860 = vunpack.c.l.b16 %v631
        %v861 = vunpack.c.l.b16 %v632
        %v862 = vunpack.c.l.b16 %v633
        %v863 = vunpack.c.l.b16 %v634
        %v864 = vunpack.c.l.b16 %v635
        %v865 = vunpack.c.l.b16 %v636
        %v866 = vunpack.c.l.b16 %v637
        %v867 = vunpack.c.l.b16 %v638
        %v868 = vunpack.c.l.b16 %v639
        %v869 = vunpack.c.l.b16 %v640
        %v870 = vunpack.c.l.b16 %v641
        %v871 = vunpack.c.l.b16 %v642
        %v872 = vunpack.c.l.b16 %v643
        %v873 = vunpack.c.l.b16 %v644
        %v874 = vunpack.c.l.b16 %v645
        %v875 = vunpack.c.l.b16 %v646
        %v876 = vunpack.c.l.b16 %v647
        %v877 = vunpack.c.l.b16 %v648
        %v878 = vunpack.c.l.b16 %v649
        %v879 = vunpack.c.l.b16 %v650
        %v880 = vunpack.c.l.b16 %v651
        %v881 = vunpack.c.l.b16 %v652
        %v882 = vunpack.c.l.b16 %v653
        %v883 = vunpack.c.l.b16 %v654
        %v884 = vunpack.c.l.b16 %v655
        %v885 = vunpack.c.l.b16 %v656
        %v886 = vunpack.c.l.b16 %v657
        %v887 = vunpack.c.l.b16 %v658
        %v888 = vunpack.c.l.b16 %v659
        %v889 = vunpack.c.l.b16 %v660
        %v890 = vunpack.c.l.b16 %v661
        %v891 = vunpack.c.l.b16 %v662
        %v892 = vunpack.c.l.b16 %v663
        %v893 = vunpack.c.l.b16 %v664
        %v894 = vunpack.c.l.b16 %v665
        %v895 = vunpack.c.l.b16 %v666
        %v896 = vunpack.c.l.b16 %v667
        %v897 = vunpack.c.l.b16 %v668
        %v898 = vunpack.c.l.b16 %v669
        %v899 = vunpack.c.l.b16 %v670
        %v900 = vunpack.c.l.b16 %v671
        %v901 = vpack.c.b16 %v806, %v805
        %v902 = vpack.c.b16 %v808, %v807
        %v903 = vpack.c.b16 %v810, %v809
        %v904 = vpack.c.b16 %v812, %v811
        %v905 = vpack.c.b16 %v814, %v813
        %v906 = vpack.c.b16 %v816, %v815
        %v907 = vpack.c.b16 %v818, %v817
        %v908 = vpack.c.b16 %v820, %v819
        %v909 = vpack.c.b16 %v822, %v821
        %v910 = vpack.c.b16 %v824, %v823
        %v911 = vpack.c.b16 %v826, %v825
        %v912 = vpack.c.b16 %v828, %v827
        %v913 = vpack.c.b16 %v830, %v829
        %v914 = vpack.c.b16 %v832, %v831
        %v915 = vpack.c.b16 %v834, %v833
        %v916 = vpack.c.b16 %v836, %v835
        %v917 = vpack.c.b16 %v838, %v837
        %v918 = vpack.c.b16 %v840, %v839
        %v919 = vpack.c.b16 %v842, %v841
        %v920 = vpack.c.b16 %v844, %v843
        %v921 = vpack.c.b16 %v846, %v845
        %v922 = vpack.c.b16 %v848, %v847
        %v923 = vpack.c.b16 %v850, %v849
        %v924 = vpack.c.b16 %v852, %v851
        %v925 = vpack.c.b16 %v854, %v853
        %v926 = vpack.c.b16 %v856, %v855
        %v927 = vpack.c.b16 %v858, %v857
        %v928 = vpack.c.b16 %v860, %v859
        %v929 = vpack.c.b16 %v862, %v861
        %v930 = vpack.c.b16 %v864, %v863
        %v931 = vpack.c.b16 %v866, %v865
        %v932 = vpack.c.b16 %v868, %v867
        %v933 = vpack.c.b16 %v870, %v869
        %v934 = vpack.c.b16 %v872, %v871
        %v935 = vpack.c.b16 %v874, %v873
        %v936 = vpack.c.b16 %v876, %v875
        %v937 = vpack.c.b16 %v878, %v877
        %v938 = vpack.c.b16 %v880, %v879
        %v939 = vpack.c.b16 %v882, %v881
        %v940 = vpack.c.b16 %v884, %v883
        %v941 = vpack.c.b16 %v886, %v885
        %v942 = vpack.c.b16 %v888, %v887
        %v943 = vpack.c.b16 %v890, %v889
        %v944 = vpack.c.b16 %v892, %v891
        %v945 = vpack.c.b16 %v894, %v893
        %v946 = vpack.c.b16 %v896, %v895
        %v947 = vpack.c.b16 %v898, %v897
        %v948 = vpack.c.b16 %v900, %v899
        %997 = vmatprep.subr.bf16.mxu0 0
        %998 = vmatpush1.bf16.msra.mxu0 %v901
        %999 = vmatprep.subr.bf16.mxu0 0
        %1000 = vmatpush1.bf16.msra.mxu0 %v902
        %1001 = vmatprep.subr.bf16.mxu0 0
        %1002 = vmatpush1.bf16.msra.mxu0 %v903
        %1003 = vmatprep.subr.bf16.mxu0 0
        %1004 = vmatpush1.bf16.msra.mxu0 %v904
        %1005 = vmatprep.subr.bf16.mxu0 0
        %1006 = vmatpush1.bf16.msra.mxu0 %v905
        %1007 = vmatprep.subr.bf16.mxu0 0
        %1008 = vmatpush1.bf16.msra.mxu0 %v906
        %1009 = vmatprep.subr.bf16.mxu0 0
        %1010 = vmatpush1.bf16.msra.mxu0 %v907
        %1011 = vmatprep.subr.bf16.mxu0 0
        %1012 = vmatpush1.bf16.msra.mxu0 %v908
        %1013 = vmatprep.subr.bf16.mxu0 0
        %1014 = vmatpush1.bf16.msra.mxu0 %v909
        %1015 = vmatprep.subr.bf16.mxu0 0
        %1016 = vmatpush1.bf16.msra.mxu0 %v910
        %1017 = vmatprep.subr.bf16.mxu0 0
        %1018 = vmatpush1.bf16.msra.mxu0 %v911
        %1019 = vmatprep.subr.bf16.mxu0 0
        %1020 = vmatpush1.bf16.msra.mxu0 %v912
        %1021 = vmatprep.subr.bf16.mxu0 0
        %1022 = vmatpush1.bf16.msra.mxu0 %v913
        %1023 = vmatprep.subr.bf16.mxu0 0
        %1024 = vmatpush1.bf16.msra.mxu0 %v914
        %1025 = vmatprep.subr.bf16.mxu0 0
        %1026 = vmatpush1.bf16.msra.mxu0 %v915
        %1027 = vmatprep.subr.bf16.mxu0 0
        %1028 = vmatpush1.bf16.msra.mxu0 %v916
        %1029 = vmatprep.mubr.bf16.mxu0 %v698
        %1030 = vmatmul.mubr.bf16.gmra.mrb[0].mxu0 %v697
        %v1031 = vpop.f32.mrb[0].mxu0
        %v1032 = vadd.f32 %v677, %v1031
        %v1033 = vpop.f32.mrb[0].mxu0
        %v1034 = vpop.f32.mrb[0].mxu0
        %v1035 = vadd.f32 %v677, %v1034
        %v1036 = vpop.f32.mrb[0].mxu0
        %1037 = vdwg.mxu0
        %1038 = vmatprep.subr.bf16.mxu0 0
        %1039 = vmatpush1.bf16.msra.mxu0 %v917
        %1040 = vmatprep.subr.bf16.mxu0 0
        %1041 = vmatpush1.bf16.msra.mxu0 %v918
        %1042 = vmatprep.subr.bf16.mxu0 0
        %1043 = vmatpush1.bf16.msra.mxu0 %v919
        %1044 = vmatprep.subr.bf16.mxu0 0
        %1045 = vmatpush1.bf16.msra.mxu0 %v920
        %1046 = vmatprep.subr.bf16.mxu0 0
        %1047 = vmatpush1.bf16.msra.mxu0 %v921
        %1048 = vmatprep.subr.bf16.mxu0 0
        %1049 = vmatpush1.bf16.msra.mxu0 %v922
        %1050 = vmatprep.subr.bf16.mxu0 0
        %1051 = vmatpush1.bf16.msra.mxu0 %v923
        %1052 = vmatprep.subr.bf16.mxu0 0
        %1053 = vmatpush1.bf16.msra.mxu0 %v924
        %1054 = vmatprep.subr.bf16.mxu0 0
        %1055 = vmatpush1.bf16.msra.mxu0 %v925
        %1056 = vmatprep.subr.bf16.mxu0 0
        %1057 = vmatpush1.bf16.msra.mxu0 %v926
        %1058 = vmatprep.subr.bf16.mxu0 0
        %1059 = vmatpush1.bf16.msra.mxu0 %v927
        %1060 = vmatprep.subr.bf16.mxu0 0
        %1061 = vmatpush1.bf16.msra.mxu0 %v928
        %1062 = vmatprep.subr.bf16.mxu0 0
        %1063 = vmatpush1.bf16.msra.mxu0 %v929
        %1064 = vmatprep.subr.bf16.mxu0 0
        %1065 = vmatpush1.bf16.msra.mxu0 %v930
        %1066 = vmatprep.subr.bf16.mxu0 0
        %1067 = vmatpush1.bf16.msra.mxu0 %v931
        %1068 = vmatprep.subr.bf16.mxu0 0
        %1069 = vmatpush1.bf16.msra.mxu0 %v932
        %1070 = vmatprep.mubr.bf16.mxu0 %v700
        %1071 = vmatmul.mubr.bf16.gmra.mrb[0].mxu0 %v699
        %v1072 = vpop.f32.mrb[0].mxu0
        %v1073 = vadd.f32 %v1032, %v1072
        %v1074 = vpop.f32.mrb[0].mxu0
        %v1075 = vpop.f32.mrb[0].mxu0
        %v1076 = vadd.f32 %v1035, %v1075
        %v1077 = vpop.f32.mrb[0].mxu0
        %1078 = vdwg.mxu0
        %1079 = vmatprep.subr.bf16.mxu0 0
        %1080 = vmatpush1.bf16.msra.mxu0 %v933
        %1081 = vmatprep.subr.bf16.mxu0 0
        %1082 = vmatpush1.bf16.msra.mxu0 %v934
        %1083 = vmatprep.subr.bf16.mxu0 0
        %1084 = vmatpush1.bf16.msra.mxu0 %v935
        %1085 = vmatprep.subr.bf16.mxu0 0
        %1086 = vmatpush1.bf16.msra.mxu0 %v936
        %1087 = vmatprep.subr.bf16.mxu0 0
        %1088 = vmatpush1.bf16.msra.mxu0 %v937
        %1089 = vmatprep.subr.bf16.mxu0 0
        %1090 = vmatpush1.bf16.msra.mxu0 %v938
        %1091 = vmatprep.subr.bf16.mxu0 0
        %1092 = vmatpush1.bf16.msra.mxu0 %v939
        %1093 = vmatprep.subr.bf16.mxu0 0
        %1094 = vmatpush1.bf16.msra.mxu0 %v940
        %1095 = vmatprep.subr.bf16.mxu0 0
        %1096 = vmatpush1.bf16.msra.mxu0 %v941
        %1097 = vmatprep.subr.bf16.mxu0 0
        %1098 = vmatpush1.bf16.msra.mxu0 %v942
        %1099 = vmatprep.subr.bf16.mxu0 0
        %1100 = vmatpush1.bf16.msra.mxu0 %v943
        %1101 = vmatprep.subr.bf16.mxu0 0
        %1102 = vmatpush1.bf16.msra.mxu0 %v944
        %1103 = vmatprep.subr.bf16.mxu0 0
        %1104 = vmatpush1.bf16.msra.mxu0 %v945
        %1105 = vmatprep.subr.bf16.mxu0 0
        %1106 = vmatpush1.bf16.msra.mxu0 %v946
        %1107 = vmatprep.subr.bf16.mxu0 0
        %1108 = vmatpush1.bf16.msra.mxu0 %v947
        %1109 = vmatprep.subr.bf16.mxu0 0
        %1110 = vmatpush1.bf16.msra.mxu0 %v948
        %1111 = vmatprep.mubr.bf16.mxu0 %v702
        %1112 = vmatmul.mubr.bf16.gmra.mrb[0].mxu0 %v701
        %v1113 = vpop.f32.mrb[0].mxu0
        %v1114 = vadd.f32 %v1073, %v1113
        %v1115 = vpop.f32.mrb[0].mxu0
        %v1116 = vpop.f32.mrb[0].mxu0
        %v1117 = vadd.f32 %v1076, %v1116
        %v1118 = vpop.f32.mrb[0].mxu0
        %1119 = vdwg.mxu0
        %s1120 = sld [smem:[#allocation3]]
        %vm1121 = vcmp.ge.f32.partialorder %v1114, 0.0
        %vm1122 = vcmp.ge.f32.partialorder %v1117, 0.0
        %v1123 = vstv %s1120
        %v1124 = vmul.f32 %v1123, %v1114
        %v1125 = vmul.f32 %v1123, %v1117
        %v1126 = vsel %vm1121, %v1114, %v1124
        %v1127 = vsel %vm1122, %v1117, %v1125
        %v1128 = vpack.c.bf16 %v1127, %v1126
        %v1129 = vld [vmem:[#allocation8] sm:$0xf]
        %v1130 = vld [vmem:[#allocation8 + $0x4] sm:$0xf]
        %v1131 = vld [vmem:[#allocation8 + $0x8] sm:$0xf]
        %v1132 = vld [vmem:[#allocation8 + $0xc] sm:$0xf]
        %v1133 = vld [vmem:[#allocation8 + $0x10] sm:$0xf]
        %v1134 = vld [vmem:[#allocation8 + $0x14] sm:$0xf]
        %v1135 = vld [vmem:[#allocation8 + $0x18] sm:$0xf]
        %v1136 = vld [vmem:[#allocation8 + $0x1c] sm:$0xf]
        %v1137 = vld [vmem:[#allocation8 + $0x20] sm:$0xf]
        %v1138 = vld [vmem:[#allocation8 + $0x24] sm:$0xf]
        %v1139 = vld [vmem:[#allocation8 + $0x28] sm:$0xf]
        %v1140 = vld [vmem:[#allocation8 + $0x2c] sm:$0xf]
        %v1141 = vld [vmem:[#allocation8 + $0x30] sm:$0xf]
        %v1142 = vld [vmem:[#allocation8 + $0x34] sm:$0xf]
        %v1143 = vld [vmem:[#allocation8 + $0x38] sm:$0xf]
        %v1144 = vld [vmem:[#allocation8 + $0x3c] sm:$0xf]
        %v1145 = vld [vmem:[%s6] sm:$0x1]
        %v1147 = vlaneseq
        %v1148 = vshrl.u32 %v1147, 7
        %v1149 = vsub.s32 0, %v1148
        %v1150 = vrot.slane %v1145, %v1149
        %v1168 = vunpack.c.l.b16 %v1129
        %v1169 = vunpack.c.l.b16 %v1130
        %v1170 = vunpack.c.l.b16 %v1131
        %v1171 = vunpack.c.l.b16 %v1132
        %v1172 = vunpack.c.l.b16 %v1133
        %v1173 = vunpack.c.l.b16 %v1134
        %v1174 = vunpack.c.l.b16 %v1135
        %v1175 = vunpack.c.l.b16 %v1136
        %v1176 = vunpack.c.l.b16 %v1137
        %v1177 = vunpack.c.l.b16 %v1138
        %v1178 = vunpack.c.l.b16 %v1139
        %v1179 = vunpack.c.l.b16 %v1140
        %v1180 = vunpack.c.l.b16 %v1141
        %v1181 = vunpack.c.l.b16 %v1142
        %v1182 = vunpack.c.l.b16 %v1143
        %v1183 = vunpack.c.l.b16 %v1144
        %v1184 = vpack.c.b16 %v1169, %v1168
        %v1185 = vpack.c.b16 %v1171, %v1170
        %v1186 = vpack.c.b16 %v1173, %v1172
        %v1187 = vpack.c.b16 %v1175, %v1174
        %v1188 = vpack.c.b16 %v1177, %v1176
        %v1189 = vpack.c.b16 %v1179, %v1178
        %v1190 = vpack.c.b16 %v1181, %v1180
        %v1191 = vpack.c.b16 %v1183, %v1182
        %1200 = vmatprep.subr.bf16.mxu0 0
        %1201 = vmatpush1.bf16.msra.mxu0 %v1184
        %1202 = vmatprep.subr.bf16.mxu0 0
        %1203 = vmatpush1.bf16.msra.mxu0 %v1185
        %1204 = vmatprep.subr.bf16.mxu0 0
        %1205 = vmatpush1.bf16.msra.mxu0 %v1186
        %1206 = vmatprep.subr.bf16.mxu0 0
        %1207 = vmatpush1.bf16.msra.mxu0 %v1187
        %1208 = vmatprep.subr.bf16.mxu0 0
        %1209 = vmatpush1.bf16.msra.mxu0 %v1188
        %1210 = vmatprep.subr.bf16.mxu0 0
        %1211 = vmatpush1.bf16.msra.mxu0 %v1189
        %1212 = vmatprep.subr.bf16.mxu0 0
        %1213 = vmatpush1.bf16.msra.mxu0 %v1190
        %1214 = vmatprep.subr.bf16.mxu0 0
        %1215 = vmatpush1.bf16.msra.mxu0 %v1191
        %1216 = vmatprep.subr.bf16.mxu0 0
        %1217 = vmatpush1.bf16.msra.mxu0 0
        %1218 = vmatprep.subr.bf16.mxu0 0
        %1219 = vmatpush1.bf16.msra.mxu0 0
        %1220 = vmatprep.subr.bf16.mxu0 0
        %1221 = vmatpush1.bf16.msra.mxu0 0
        %1222 = vmatprep.subr.bf16.mxu0 0
        %1223 = vmatpush1.bf16.msra.mxu0 0
        %1224 = vmatprep.subr.bf16.mxu0 0
        %1225 = vmatpush1.bf16.msra.mxu0 0
        %1226 = vmatprep.subr.bf16.mxu0 0
        %1227 = vmatpush1.bf16.msra.mxu0 0
        %1228 = vmatprep.subr.bf16.mxu0 0
        %1229 = vmatpush1.bf16.msra.mxu0 0
        %1230 = vmatprep.subr.bf16.mxu0 0
        %1231 = vmatpush1.bf16.msra.mxu0 0
        %1232 = vmatprep.mubr.bf16.mxu0 0
        %1233 = vmatmul.mubr.bf16.gmra.mrb[0].mxu0 %v1128
        %v1234 = vpop.f32.mrb[0].mxu0
        %v1235 = vadd.f32 %v1150, %v1234
        %v1236 = vpop.f32.mrb[0].mxu0
        %v1237 = vpop.f32.mrb[0].mxu0
        %v1238 = vadd.f32 %v1150, %v1237
        %v1239 = vpop.f32.mrb[0].mxu0
        %1240 = vdwg.mxu0
        %s1241 = sld [smem:[#allocation3 + $0x1]]
        %vm1242 = vcmp.ge.f32.partialorder %v1235, 0.0
        %vm1243 = vcmp.ge.f32.partialorder %v1238, 0.0
        %v1244 = vstv %s1241
        %v1245 = vmul.f32 %v1244, %v1235
        %v1246 = vmul.f32 %v1244, %v1238
        %v1247 = vsel %vm1242, %v1235, %v1245
        %v1248 = vsel %vm1243, %v1238, %v1246
        %v1249 = vpack.c.bf16 %v1248, %v1247
        %v1250 = vld [vmem:[#allocation10] sm:$0xf]
        %v1251 = vld [vmem:[#allocation10 + $0x4] sm:$0xf]
        %v1252 = vld [vmem:[#allocation10 + $0x8] sm:$0xf]
        %v1253 = vld [vmem:[#allocation10 + $0xc] sm:$0xf]
        %v1254 = vld [vmem:[#allocation10 + $0x10] sm:$0xf]
        %v1255 = vld [vmem:[#allocation10 + $0x14] sm:$0xf]
        %v1256 = vld [vmem:[#allocation10 + $0x18] sm:$0xf]
        %v1257 = vld [vmem:[#allocation10 + $0x1c] sm:$0xf]
        %v1258 = vld [vmem:[#allocation10 + $0x20] sm:$0xf]
        %v1259 = vld [vmem:[#allocation10 + $0x24] sm:$0xf]
        %v1260 = vld [vmem:[#allocation10 + $0x28] sm:$0xf]
        %v1261 = vld [vmem:[#allocation10 + $0x2c] sm:$0xf]
        %v1262 = vld [vmem:[#allocation10 + $0x30] sm:$0xf]
        %v1263 = vld [vmem:[#allocation10 + $0x34] sm:$0xf]
        %v1264 = vld [vmem:[#allocation10 + $0x38] sm:$0xf]
        %v1265 = vld [vmem:[#allocation10 + $0x3c] sm:$0xf]
        %v1266 = vld [vmem:[%s8] sm:$0x1]
        %v1268 = vlaneseq
        %v1269 = vshrl.u32 %v1268, 7
        %v1270 = vsub.s32 0, %v1269
        %v1271 = vrot.slane %v1266, %v1270
        %v1289 = vunpack.c.l.b16 %v1250
        %v1290 = vunpack.c.l.b16 %v1251
        %v1291 = vunpack.c.l.b16 %v1252
        %v1292 = vunpack.c.l.b16 %v1253
        %v1293 = vunpack.c.l.b16 %v1254
        %v1294 = vunpack.c.l.b16 %v1255
        %v1295 = vunpack.c.l.b16 %v1256
        %v1296 = vunpack.c.l.b16 %v1257
        %v1297 = vunpack.c.l.b16 %v1258
        %v1298 = vunpack.c.l.b16 %v1259
        %v1299 = vunpack.c.l.b16 %v1260
        %v1300 = vunpack.c.l.b16 %v1261
        %v1301 = vunpack.c.l.b16 %v1262
        %v1302 = vunpack.c.l.b16 %v1263
        %v1303 = vunpack.c.l.b16 %v1264
        %v1304 = vunpack.c.l.b16 %v1265
        %v1305 = vpack.c.b16 %v1290, %v1289
        %v1306 = vpack.c.b16 %v1292, %v1291
        %v1307 = vpack.c.b16 %v1294, %v1293
        %v1308 = vpack.c.b16 %v1296, %v1295
        %v1309 = vpack.c.b16 %v1298, %v1297
        %v1310 = vpack.c.b16 %v1300, %v1299
        %v1311 = vpack.c.b16 %v1302, %v1301
        %v1312 = vpack.c.b16 %v1304, %v1303
        %1321 = vmatprep.subr.bf16.mxu0 0
        %1322 = vmatpush1.bf16.msra.mxu0 %v1305
        %1323 = vmatprep.subr.bf16.mxu0 0
        %1324 = vmatpush1.bf16.msra.mxu0 %v1306
        %1325 = vmatprep.subr.bf16.mxu0 0
        %1326 = vmatpush1.bf16.msra.mxu0 %v1307
        %1327 = vmatprep.subr.bf16.mxu0 0
        %1328 = vmatpush1.bf16.msra.mxu0 %v1308
        %1329 = vmatprep.subr.bf16.mxu0 0
        %1330 = vmatpush1.bf16.msra.mxu0 %v1309
        %1331 = vmatprep.subr.bf16.mxu0 0
        %1332 = vmatpush1.bf16.msra.mxu0 %v1310
        %1333 = vmatprep.subr.bf16.mxu0 0
        %1334 = vmatpush1.bf16.msra.mxu0 %v1311
        %1335 = vmatprep.subr.bf16.mxu0 0
        %1336 = vmatpush1.bf16.msra.mxu0 %v1312
        %1337 = vmatprep.subr.bf16.mxu0 0
        %1338 = vmatpush1.bf16.msra.mxu0 0
        %1339 = vmatprep.subr.bf16.mxu0 0
        %1340 = vmatpush1.bf16.msra.mxu0 0
        %1341 = vmatprep.subr.bf16.mxu0 0
        %1342 = vmatpush1.bf16.msra.mxu0 0
        %1343 = vmatprep.subr.bf16.mxu0 0
        %1344 = vmatpush1.bf16.msra.mxu0 0
        %1345 = vmatprep.subr.bf16.mxu0 0
        %1346 = vmatpush1.bf16.msra.mxu0 0
        %1347 = vmatprep.subr.bf16.mxu0 0
        %1348 = vmatpush1.bf16.msra.mxu0 0
        %1349 = vmatprep.subr.bf16.mxu0 0
        %1350 = vmatpush1.bf16.msra.mxu0 0
        %1351 = vmatprep.subr.bf16.mxu0 0
        %1352 = vmatpush1.bf16.msra.mxu0 0
        %1353 = vmatprep.mubr.bf16.mxu0 0
        %1354 = vmatmul.mubr.bf16.gmra.mrb[0].mxu0 %v1249
        %v1355 = vpop.f32.mrb[0].mxu0
        %v1356 = vadd.f32 %v1271, %v1355
        %v1357 = vpop.f32.mrb[0].mxu0
        %v1358 = vpop.f32.mrb[0].mxu0
        %v1359 = vadd.f32 %v1271, %v1358
        %v1360 = vpop.f32.mrb[0].mxu0
        %1361 = vdwg.mxu0
        %s1362 = sld [smem:[#allocation3 + $0x2]]
        %vm1363 = vcmp.ge.f32.partialorder %v1356, 0.0
        %vm1364 = vcmp.ge.f32.partialorder %v1359, 0.0
        %v1365 = vstv %s1362
        %v1366 = vmul.f32 %v1365, %v1356
        %v1367 = vmul.f32 %v1365, %v1359
        %v1368 = vsel %vm1363, %v1356, %v1366
        %v1369 = vsel %vm1364, %v1359, %v1367
        %v1370 = vpack.c.bf16 %v1369, %v1368
        %v1371 = vld [vmem:[#allocation11] sm:$0xf]
        %v1372 = vld [vmem:[#allocation11 + $0x4] sm:$0xf]
        %v1373 = vld [vmem:[#allocation11 + $0x8] sm:$0xf]
        %v1374 = vld [vmem:[#allocation11 + $0xc] sm:$0xf]
        %v1375 = vld [vmem:[#allocation11 + $0x10] sm:$0xf]
        %v1376 = vld [vmem:[#allocation11 + $0x14] sm:$0xf]
        %v1377 = vld [vmem:[#allocation11 + $0x18] sm:$0xf]
        %v1378 = vld [vmem:[#allocation11 + $0x1c] sm:$0xf]
        %v1379 = vld [vmem:[#allocation11 + $0x20] sm:$0xf]
        %v1380 = vld [vmem:[#allocation11 + $0x24] sm:$0xf]
        %v1381 = vld [vmem:[#allocation11 + $0x28] sm:$0xf]
        %v1382 = vld [vmem:[#allocation11 + $0x2c] sm:$0xf]
        %v1383 = vld [vmem:[#allocation11 + $0x30] sm:$0xf]
        %v1384 = vld [vmem:[#allocation11 + $0x34] sm:$0xf]
        %v1385 = vld [vmem:[#allocation11 + $0x38] sm:$0xf]
        %v1386 = vld [vmem:[#allocation11 + $0x3c] sm:$0xf]
        %v1387 = vld [vmem:[%s10] sm:$0x1]
        %v1389 = vlaneseq
        %v1390 = vshrl.u32 %v1389, 7
        %v1391 = vsub.s32 0, %v1390
        %v1392 = vrot.slane %v1387, %v1391
        %v1410 = vunpack.c.l.b16 %v1371
        %v1411 = vunpack.c.l.b16 %v1372
        %v1412 = vunpack.c.l.b16 %v1373
        %v1413 = vunpack.c.l.b16 %v1374
        %v1414 = vunpack.c.l.b16 %v1375
        %v1415 = vunpack.c.l.b16 %v1376
        %v1416 = vunpack.c.l.b16 %v1377
        %v1417 = vunpack.c.l.b16 %v1378
        %v1418 = vunpack.c.l.b16 %v1379
        %v1419 = vunpack.c.l.b16 %v1380
        %v1420 = vunpack.c.l.b16 %v1381
        %v1421 = vunpack.c.l.b16 %v1382
        %v1422 = vunpack.c.l.b16 %v1383
        %v1423 = vunpack.c.l.b16 %v1384
        %v1424 = vunpack.c.l.b16 %v1385
        %v1425 = vunpack.c.l.b16 %v1386
        %v1426 = vpack.c.b16 %v1411, %v1410
        %v1427 = vpack.c.b16 %v1413, %v1412
        %v1428 = vpack.c.b16 %v1415, %v1414
        %v1429 = vpack.c.b16 %v1417, %v1416
        %v1430 = vpack.c.b16 %v1419, %v1418
        %v1431 = vpack.c.b16 %v1421, %v1420
        %v1432 = vpack.c.b16 %v1423, %v1422
        %v1433 = vpack.c.b16 %v1425, %v1424
        %1442 = vmatprep.subr.bf16.mxu0 0
        %1443 = vmatpush1.bf16.msra.mxu0 %v1426
        %1444 = vmatprep.subr.bf16.mxu0 0
        %1445 = vmatpush1.bf16.msra.mxu0 %v1427
        %1446 = vmatprep.subr.bf16.mxu0 0
        %1447 = vmatpush1.bf16.msra.mxu0 %v1428
        %1448 = vmatprep.subr.bf16.mxu0 0
        %1449 = vmatpush1.bf16.msra.mxu0 %v1429
        %1450 = vmatprep.subr.bf16.mxu0 0
        %1451 = vmatpush1.bf16.msra.mxu0 %v1430
        %1452 = vmatprep.subr.bf16.mxu0 0
        %1453 = vmatpush1.bf16.msra.mxu0 %v1431
        %1454 = vmatprep.subr.bf16.mxu0 0
        %1455 = vmatpush1.bf16.msra.mxu0 %v1432
        %1456 = vmatprep.subr.bf16.mxu0 0
        %1457 = vmatpush1.bf16.msra.mxu0 %v1433
        %1458 = vmatprep.subr.bf16.mxu0 0
        %1459 = vmatpush1.bf16.msra.mxu0 0
        %1460 = vmatprep.subr.bf16.mxu0 0
        %1461 = vmatpush1.bf16.msra.mxu0 0
        %1462 = vmatprep.subr.bf16.mxu0 0
        %1463 = vmatpush1.bf16.msra.mxu0 0
        %1464 = vmatprep.subr.bf16.mxu0 0
        %1465 = vmatpush1.bf16.msra.mxu0 0
        %1466 = vmatprep.subr.bf16.mxu0 0
        %1467 = vmatpush1.bf16.msra.mxu0 0
        %1468 = vmatprep.subr.bf16.mxu0 0
        %1469 = vmatpush1.bf16.msra.mxu0 0
        %1470 = vmatprep.subr.bf16.mxu0 0
        %1471 = vmatpush1.bf16.msra.mxu0 0
        %1472 = vmatprep.subr.bf16.mxu0 0
        %1473 = vmatpush1.bf16.msra.mxu0 0
        %1474 = vmatprep.mubr.bf16.mxu0 0
        %1475 = vmatmul.mubr.bf16.gmra.mrb[0].mxu0 %v1370
        %v1476 = vpop.f32.mrb[0].mxu0
        %v1477 = vadd.f32 %v1392, %v1476
        %v1478 = vpop.f32.mrb[0].mxu0
        %v1479 = vpop.f32.mrb[0].mxu0
        %v1480 = vadd.f32 %v1392, %v1479
        %v1481 = vpop.f32.mrb[0].mxu0
        %1482 = vdwg.mxu0
        %s1483 = sld [smem:[#allocation3 + $0x3]]
        %vm1484 = vcmp.ge.f32.partialorder %v1477, 0.0
        %vm1485 = vcmp.ge.f32.partialorder %v1480, 0.0
        %v1486 = vstv %s1483
        %v1487 = vmul.f32 %v1486, %v1477
        %v1488 = vmul.f32 %v1486, %v1480
        %v1489 = vsel %vm1484, %v1477, %v1487
        %v1490 = vsel %vm1485, %v1480, %v1488
        %v1491 = vpack.c.bf16 %v1490, %v1489
        %v1492 = vld [vmem:[%s11] sm:$0xf]
        %v1493 = vld [vmem:[%s11 + $0x4] sm:$0xf]
        %v1494 = vld [vmem:[%s11 + $0x8] sm:$0xf]
        %v1495 = vld [vmem:[%s11 + $0xc] sm:$0xf]
        %v1496 = vld [vmem:[%s11 + $0x10] sm:$0xf]
        %v1497 = vld [vmem:[%s11 + $0x14] sm:$0xf]
        %v1498 = vld [vmem:[%s11 + $0x18] sm:$0xf]
        %v1499 = vld [vmem:[%s11 + $0x1c] sm:$0xf]
        %v1500 = vld [vmem:[%s11 + $0x20] sm:$0xf]
        %v1501 = vld [vmem:[%s11 + $0x24] sm:$0xf]
        %v1502 = vld [vmem:[%s11 + $0x28] sm:$0xf]
        %v1503 = vld [vmem:[%s11 + $0x2c] sm:$0xf]
        %v1504 = vld [vmem:[%s11 + $0x30] sm:$0xf]
        %v1505 = vld [vmem:[%s11 + $0x34] sm:$0xf]
        %v1506 = vld [vmem:[%s11 + $0x38] sm:$0xf]
        %v1507 = vld [vmem:[%s11 + $0x3c] sm:$0xf]
        %v1508 = vld [vmem:[%s12] sm:$0x1]
        %v1510 = vlaneseq
        %v1511 = vshrl.u32 %v1510, 7
        %v1512 = vsub.s32 0, %v1511
        %v1513 = vrot.slane %v1508, %v1512
        %v1531 = vunpack.c.l.b16 %v1492
        %v1532 = vunpack.c.l.b16 %v1493
        %v1533 = vunpack.c.l.b16 %v1494
        %v1534 = vunpack.c.l.b16 %v1495
        %v1535 = vunpack.c.l.b16 %v1496
        %v1536 = vunpack.c.l.b16 %v1497
        %v1537 = vunpack.c.l.b16 %v1498
        %v1538 = vunpack.c.l.b16 %v1499
        %v1539 = vunpack.c.l.b16 %v1500
        %v1540 = vunpack.c.l.b16 %v1501
        %v1541 = vunpack.c.l.b16 %v1502
        %v1542 = vunpack.c.l.b16 %v1503
        %v1543 = vunpack.c.l.b16 %v1504
        %v1544 = vunpack.c.l.b16 %v1505
        %v1545 = vunpack.c.l.b16 %v1506
        %v1546 = vunpack.c.l.b16 %v1507
        %v1547 = vpack.c.b16 %v1532, %v1531
        %v1548 = vpack.c.b16 %v1534, %v1533
        %v1549 = vpack.c.b16 %v1536, %v1535
        %v1550 = vpack.c.b16 %v1538, %v1537
        %v1551 = vpack.c.b16 %v1540, %v1539
        %v1552 = vpack.c.b16 %v1542, %v1541
        %v1553 = vpack.c.b16 %v1544, %v1543
        %v1554 = vpack.c.b16 %v1546, %v1545
        %1563 = vmatprep.subr.bf16.mxu0 0
        %1564 = vmatpush1.bf16.msra.mxu0 %v1547
        %1565 = vmatprep.subr.bf16.mxu0 0
        %1566 = vmatpush1.bf16.msra.mxu0 %v1548
        %1567 = vmatprep.subr.bf16.mxu0 0
        %1568 = vmatpush1.bf16.msra.mxu0 %v1549
        %1569 = vmatprep.subr.bf16.mxu0 0
        %1570 = vmatpush1.bf16.msra.mxu0 %v1550
        %1571 = vmatprep.subr.bf16.mxu0 0
        %1572 = vmatpush1.bf16.msra.mxu0 %v1551
        %1573 = vmatprep.subr.bf16.mxu0 0
        %1574 = vmatpush1.bf16.msra.mxu0 %v1552
        %1575 = vmatprep.subr.bf16.mxu0 0
        %1576 = vmatpush1.bf16.msra.mxu0 %v1553
        %1577 = vmatprep.subr.bf16.mxu0 0
        %1578 = vmatpush1.bf16.msra.mxu0 %v1554
        %1579 = vmatprep.subr.bf16.mxu0 0
        %1580 = vmatpush1.bf16.msra.mxu0 0
        %1581 = vmatprep.subr.bf16.mxu0 0
        %1582 = vmatpush1.bf16.msra.mxu0 0
        %1583 = vmatprep.subr.bf16.mxu0 0
        %1584 = vmatpush1.bf16.msra.mxu0 0
        %1585 = vmatprep.subr.bf16.mxu0 0
        %1586 = vmatpush1.bf16.msra.mxu0 0
        %1587 = vmatprep.subr.bf16.mxu0 0
        %1588 = vmatpush1.bf16.msra.mxu0 0
        %1589 = vmatprep.subr.bf16.mxu0 0
        %1590 = vmatpush1.bf16.msra.mxu0 0
        %1591 = vmatprep.subr.bf16.mxu0 0
        %1592 = vmatpush1.bf16.msra.mxu0 0
        %1593 = vmatprep.subr.bf16.mxu0 0
        %1594 = vmatpush1.bf16.msra.mxu0 0
        %1595 = vmatprep.mubr.bf16.mxu0 0
        %1596 = vmatmul.mubr.bf16.gmra.mrb[0].mxu0 %v1491
        %v1597 = vpop.f32.mrb[0].mxu0
        %v1598 = vadd.f32 %v1513, %v1597
        %v1599 = vpop.f32.mrb[0].mxu0
        %v1600 = vpop.f32.mrb[0].mxu0
        %v1601 = vadd.f32 %v1513, %v1600
        %v1602 = vpop.f32.mrb[0].mxu0
        %1603 = vdwg.mxu0
        %s1604 = sld [smem:[#allocation3 + $0x4]]
        %vm1605 = vcmp.ge.f32.partialorder %v1598, 0.0
        %vm1606 = vcmp.ge.f32.partialorder %v1601, 0.0
        %v1607 = vstv %s1604
        %v1608 = vmul.f32 %v1607, %v1598
        %v1609 = vmul.f32 %v1607, %v1601
        %v1610 = vsel %vm1605, %v1598, %v1608
        %v1611 = vsel %vm1606, %v1601, %v1609
        %v1612 = vld [vmem:[%s13] sm:$0xf]
        %v1613 = vpack.c.bf16 %v1611, %v1610
        %vm1614 = vcmask 523264
        %v1616 = vsel %vm1614, %v1612, 0
        %v1619 = vsel %vm1614, %v1613, 0
        %1621 = vmatprep.subr.bf16.mxu0 0
        %1622 = vmatpush1.bf16.xpose.msra.mxu0 %v1619
        %1623 = vmatprep.subr.bf16.mxu0 0
        %1624 = vmatpush1.bf16.xpose.msra.mxu0 0
        %1625 = vmatprep.subr.bf16.mxu0 0
        %1626 = vmatpush1.bf16.xpose.msra.mxu0 0
        %1627 = vmatprep.subr.bf16.mxu0 0
        %1628 = vmatpush1.bf16.xpose.msra.mxu0 0
        %1629 = vmatprep.subr.bf16.mxu0 0
        %1630 = vmatpush1.bf16.xpose.msra.mxu0 0
        %1631 = vmatprep.subr.bf16.mxu0 0
        %1632 = vmatpush1.bf16.xpose.msra.mxu0 0
        %1633 = vmatprep.subr.bf16.mxu0 0
        %1634 = vmatpush1.bf16.xpose.msra.mxu0 0
        %1635 = vmatprep.subr.bf16.mxu0 0
        %1636 = vmatpush1.bf16.xpose.msra.mxu0 0
        %1637 = vmatprep.subr.bf16.mxu0 0
        %1638 = vmatpush1.bf16.xpose.msra.mxu0 0
        %1639 = vmatprep.subr.bf16.mxu0 0
        %1640 = vmatpush1.bf16.xpose.msra.mxu0 0
        %1641 = vmatprep.subr.bf16.mxu0 0
        %1642 = vmatpush1.bf16.xpose.msra.mxu0 0
        %1643 = vmatprep.subr.bf16.mxu0 0
        %1644 = vmatpush1.bf16.xpose.msra.mxu0 0
        %1645 = vmatprep.subr.bf16.mxu0 0
        %1646 = vmatpush1.bf16.xpose.msra.mxu0 0
        %1647 = vmatprep.subr.bf16.mxu0 0
        %1648 = vmatpush1.bf16.xpose.msra.mxu0 0
        %1649 = vmatprep.subr.bf16.mxu0 0
        %1650 = vmatpush1.bf16.xpose.msra.mxu0 0
        %1651 = vmatprep.subr.bf16.mxu0 0
        %1652 = vmatpush1.bf16.xpose.msra.mxu0 0
        %1653 = vmatprep.mubr.bf16.mxu0 0
        %1654 = vmatmul.mubr.bf16.gmra.mrb[0].mxu0 %v1616
        %v1655 = vpop.f32.mrb[0].mxu0
        %v1656 = vadd.f32 0.0, %v1655
        %v1657 = vpop.f32.mrb[0].mxu0
        %v1658 = vpop.f32.mrb[0].mxu0
        %v1659 = vpop.f32.mrb[0].mxu0
        %1660 = vdwg.mxu0
        %s1661 = sld [smem:[#allocation2]]
        %v1662 = vstv %s1661
        %v1663 = vadd.f32 %v1656, %v1662
        %vm1664 = vcmask 122880
        %1665 = vst.msk [vmem:[%s551] sm:$0x1] %vm1664, %v1663
        %s1666 = sand.u32 %s340, 1
        %s1667 = scalar_lea.sflag [#allocation5], %s1666
        %s1668 = sand.u32 %s340, 1
        %s1669 = scalar_lea.vmem [#allocation13], %s1668
        // Predicated region
        $region97: #{tpu_custom_call.1} parent=75 // pred_check
          %p1670 = pneg %p350
        $region98: #{tpu_custom_call.1} parent=75 // pred_check_branch
          %1672 = sbr.rel (%p1670) target = $region100
        $region99: #{tpu_custom_call.1} parent=75 // pred_region
          %s1674 = ssub.s32 16, 16
          %1675 = vsyncadd %s1667, %s1674
          %s1676 = smul.addr %s33, 16
          %s1677 = scalar_lea.hbm %s14, %s1676
          %s1679 = sshll.u32 %s1669, 4
          %s1680 = int_to_ptr.vmem [resolvable:$true] %s1679
          %1682 = dma.vmem_to_hbm [thread:$0]  %s1680, 16, %s1677, %s1667
        $region100: #{tpu_custom_call.1} parent=75 // pred_fallthru
          _
      $region76: #{tpu_custom_call.1} parent=5 // pred_fallthru
        _
      %p1683 = scmp.le.s32.totalorder 2, %s28
      // Predicated region
      $region101: #{tpu_custom_call.1} parent=5 // pred_check
        %p1684 = pneg %p1683
      $region102: #{tpu_custom_call.1} parent=5 // pred_check_branch
        %1686 = sbr.rel (%p1684) target = $region104
      $region103: #{tpu_custom_call.1} parent=5 // pred_region
        %s1687 = ssub.s32 %s28, 2
        // Predicated region
        $region105: #{tpu_custom_call.1} parent=103 // pred_check
          %p1688 = pneg %p356
        $region106: #{tpu_custom_call.1} parent=103 // pred_check_branch
          %1690 = sbr.rel (%p1688) target = $region108
        $region107: #{tpu_custom_call.1} parent=103 // pred_region
          %s1691 = sand.u32 %s341, 1
          %s1692 = scalar_lea.sflag [#allocation5], %s1691
          %s1693 = sand.u32 %s341, 1
          %s1694 = scalar_lea.vmem [#allocation13], %s1693
          %1695 = dma.done %s1692, 16
        $region108: #{tpu_custom_call.1} parent=103 // pred_fallthru
          _
      $region104: #{tpu_custom_call.1} parent=5 // pred_fallthru
        _
    $region6: #{tpu_custom_call.1} parent=1 // loop_footer
      %s32 = sadd.s32 1, %s28
    $region7: #{tpu_custom_call.1} parent=1 // loop_footer_branch
      %27 = sbr.rel target = $region3
    $region8: #{tpu_custom_call.1} parent=1 // loop_exit
      _
    %1696 = vsyncpa [#allocation4], 1
    %s1697 = scalar_lea.sflag [#allocation4], 1
    %1698 = vsyncpa %s1697, 1
    %1699 = vsyncpa [#allocation9], 1
    %1700 = vsyncpa [#allocation12], 1
    %1701 = vsyncpa [#allocation5], 1
    %s1702 = scalar_lea.sflag [#allocation5], 1
    %1703 = vsyncpa %s1702, 1
    %1704 = vsyncpa [#allocation6], 1
    %s1705 = scalar_lea.sflag [#allocation6], 1
    %1706 = vsyncpa %s1705, 1

</llo_original>
